<compile_context>
chip_gen: v6e
topology: v6e:2x2x1
jax: 0.10.0
libtpu: 0.0.40
codegen_flags: <defaults>
</compile_context>

<pallas_src>
import functools

import jax
import jax.numpy as jnp
from jax import lax
from jax.experimental import pallas as pl
from jax.experimental.pallas import tpu as pltpu

D_MODEL = 32
HEADS = 4
D_FF = 64
BATCH = 2
SEQ = 8


def _lorentz_project(y, time_mask, block_ones, exp_scale):
    """HyboNet LorentzLinear hyperboloid re-projection, head-batched.

    y          : (N, C) linear output.
    time_mask  : (1, C) 1.0 at each head's time column.
    block_ones : (C, C) 1.0 where two columns belong to the same head
                 (all-ones matrix for a single merged head).
    exp_scale  : scalar or (1, C) exp(scale), constant within each head.

    The per-head reductions are computed as (.) @ block_ones so they run on
    the MXU and come back already broadcast over each head's columns.
    """
    f32 = jnp.float32
    y0_b = jnp.dot(y * time_mask, block_ones, preferred_element_type=f32)
    sq_b = jnp.dot(y * y, block_ones, preferred_element_type=f32)
    space_sq = jnp.maximum(sq_b - y0_b * y0_b, 1e-8)
    time = jax.nn.sigmoid(y0_b) * exp_scale + 1.1
    coef = jnp.sqrt(time * time - 1.0) * lax.rsqrt(space_sq)
    return jnp.where(time_mask > 0.5, time, y * coef)


def _encoder_layer_kernel(heads,
                          scal_ref, x_ref, pad_ref,
                          wqkv_ref, bqkv_ref, wr_ref,
                          w1_ref, b1_ref, w2_ref, b2_ref,
                          qkv_tmask_ref, qkv_scale_ref, qkv_sign_ref, m_qkv_ref,
                          headrows_ref, seg_ones_ref,
                          d_tmask_ref, m_dhead_ref,
                          d0_tmask_ref, ones_d_ref,
                          f0_tmask_ref, ones_f_ref,
                          out_ref):
    f32 = jnp.float32
    T = x_ref.shape[1]
    D = x_ref.shape[2]

    x = x_ref[0]                                   # (T, D)

    exp_sr = scal_ref[0]
    exp_s1 = scal_ref[1]
    exp_s2 = scal_ref[2]
    inv_attn_scale = scal_ref[3]
    attn_bias = scal_ref[4]

    # ---- fused Q/K/V LorentzLinear + per-head hyperboloid projection ------
    qkv = jnp.dot(x, wqkv_ref[...], preferred_element_type=f32) + bqkv_ref[...]
    qkv = _lorentz_project(qkv, qkv_tmask_ref[...], m_qkv_ref[...],
                           qkv_scale_ref[...])
    qkv = qkv * qkv_sign_ref[...]        # negate q time coords (Lorentz cinner)

    qn = qkv[:, 0:D]                     # (T, D), q with per-head time negated
    k = qkv[:, D:2 * D]
    v = qkv[:, 2 * D:3 * D]

    # Stack K/V once per head along the sublane axis and zero the other
    # heads' columns: attention becomes two plain 2-D matmuls (no per-head
    # loop, no transposes, no VMEM scratch round-trip).
    headrows = headrows_ref[...]                              # (H*T, D)
    kstack = jnp.concatenate([k] * heads, axis=0) * headrows  # (H*T, D)
    vstack = jnp.concatenate([v] * heads, axis=0) * headrows

    # scores[t, h*T + t'] = (2 + 2 * cinner(q[t,h], k[t',h])) / scale + bias
    scores = 2.0 + 2.0 * lax.dot_general(
        qn, kstack, (((1,), (1,)), ((), ())), preferred_element_type=f32)
    scores = scores * inv_attn_scale + attn_bias              # (T, H*T)
    scores = jnp.where(pad_ref[0] > 0.0, f32(-1e18), scores)

    # Softmax: a shared row max is exact because normalization is per
    # (query, head) segment and the Lorentz mid_point is scale-invariant.
    p = jnp.exp(scores - jnp.max(scores, axis=-1, keepdims=True))
    seg_sum = jnp.dot(p, seg_ones_ref[...], preferred_element_type=f32)
    p = p * pl.reciprocal(jnp.maximum(seg_sum, 1e-30), approx=True)

    ctx = jnp.dot(p, vstack, preferred_element_type=f32)      # (T, D)

    # Lorentz mid_point normalization, per head, via block-ones matmuls.
    d_tmask = d_tmask_ref[...]
    a0_b = jnp.dot(ctx * d_tmask, m_dhead_ref[...], preferred_element_type=f32)
    sq_b = jnp.dot(ctx * ctx, m_dhead_ref[...], preferred_element_type=f32)
    l_inner = sq_b - 2.0 * a0_b * a0_b
    ctx = ctx * lax.rsqrt(jnp.maximum(jnp.abs(l_inner), 1e-8))

    # ---- residual LorentzLinear (merge=True, bias=False) -------------------
    d0_tmask = d0_tmask_ref[...]
    ones_d = ones_d_ref[...]
    res = jnp.dot(ctx, wr_ref[...], preferred_element_type=f32) + x
    res = _lorentz_project(res, d0_tmask, ones_d, exp_sr)

    # ---- Lorentz position-wise feed-forward (w_2 residual bias = res) ------
    h1 = jnp.dot(res, w1_ref[...], preferred_element_type=f32) + b1_ref[...]
    h1 = _lorentz_project(h1, f0_tmask_ref[...], ones_f_ref[...], exp_s1)
    o = jnp.dot(h1, w2_ref[...], preferred_element_type=f32) + b2_ref[...] + res
    out_ref[0] = _lorentz_project(o, d0_tmask, ones_d, exp_s2)


def lorentz_encoder_layer(x, mask, params, heads=HEADS):
    """Forward pass of LorentzTransformerEncoderLayer (eval mode)."""
    B, T, D = x.shape
    dh = D // heads
    F = params["w1"].shape[1]
    HT = heads * T
    D3 = 3 * D
    f32 = jnp.float32
    _s = lambda v: jnp.asarray(v, f32)

    # Fused QKV weight / bias.
    wqkv = jnp.concatenate([params["wq"], params["wk"], params["wv"]], axis=1)
    bqkv = jnp.concatenate([params["bq"], params["bk"], params["bv"]], axis=1)

    # Scalar params with exp() / reciprocal precomputed outside the kernel.
    scal = jnp.stack([jnp.exp(_s(params["sr"])),
                      jnp.exp(_s(params["s1"])),
                      jnp.exp(_s(params["s2"])),
                      _s(1.0) / _s(params["attn_scale"]),
                      _s(params["attn_bias"])])

    # Hoisted constants: time-column masks, per-column exp(scale), cinner sign
    # vector, and 0/1 head-indicator matrices for MXU-side reductions.
    col3 = jnp.arange(D3)
    qkv_tmask = (col3 % dh == 0).astype(f32)[None, :]                  # (1, 3D)
    qkv_scale = jnp.concatenate(
        [jnp.full((1, D), jnp.exp(_s(params["sq"])), f32),
         jnp.full((1, D), jnp.exp(_s(params["sk"])), f32),
         jnp.full((1, D), jnp.exp(_s(params["sv"])), f32)], axis=1)    # (1, 3D)
    qkv_sign = jnp.where((col3 % dh == 0) & (col3 < D),
                         -1.0, 1.0).astype(f32)[None, :]               # (1, 3D)
    blk3 = col3 // dh
    m_qkv = (blk3[:, None] == blk3[None, :]).astype(f32)               # (3D, 3D)

    rows = jnp.arange(HT)
    colD = jnp.arange(D)
    headrows = ((rows // T)[:, None] == (colD // dh)[None, :]).astype(f32)
    seg_ones = ((rows // T)[:, None] == (rows // T)[None, :]).astype(f32)

    d_tmask = (colD % dh == 0).astype(f32)[None, :]
    m_dhead = ((colD // dh)[:, None] == (colD // dh)[None, :]).astype(f32)
    d0_tmask = (colD == 0).astype(f32)[None, :]
    ones_d = jnp.ones((D, D), f32)
    colF = jnp.arange(F)
    f0_tmask = (colF == 0).astype(f32)[None, :]
    ones_f = jnp.ones((F, F), f32)

    # Key-padding mask expanded to the head-stacked key axis (B, 1, H*T).
    pad = jnp.tile(jnp.asarray(mask, f32), (1, 1, heads))

    kernel = functools.partial(_encoder_layer_kernel, heads)
    const2d = lambda shape: pl.BlockSpec(shape, lambda b: (0, 0))

    grid_spec = pltpu.PrefetchScalarGridSpec(
        num_scalar_prefetch=0,
        grid=(B,),
        in_specs=[
            pl.BlockSpec(memory_space=pltpu.MemorySpace.SMEM),         # scal
            pl.BlockSpec((1, T, D), lambda b: (b, 0, 0)),              # x
            pl.BlockSpec((1, 1, HT), lambda b: (b, 0, 0)),             # pad mask
            const2d((D, D3)), const2d((1, D3)),                        # wqkv, bqkv
            const2d((D, D)),                                           # wr
            const2d((D, F)), const2d((1, F)),                          # w1, b1
            const2d((F, D)), const2d((1, D)),                          # w2, b2
            const2d((1, D3)), const2d((1, D3)), const2d((1, D3)),      # qkv consts
            const2d((D3, D3)),                                         # m_qkv
            const2d((HT, D)), const2d((HT, HT)),                       # headrows, seg
            const2d((1, D)), const2d((D, D)),                          # d_tmask, m_dhead
            const2d((1, D)), const2d((D, D)),                          # d0_tmask, ones_d
            const2d((1, F)), const2d((F, F)),                          # f0_tmask, ones_f
        ],
        out_specs=pl.BlockSpec((1, T, D), lambda b: (b, 0, 0)),
    )

    return pl.pallas_call(
        kernel,
        out_shape=jax.ShapeDtypeStruct((B, T, D), f32),
        grid_spec=grid_spec,
        compiler_params=pltpu.CompilerParams(
            dimension_semantics=("parallel",)),
    )(scal, x, pad,
      wqkv, bqkv, params["wr"],
      params["w1"], params["b1"], params["w2"], params["b2"],
      qkv_tmask, qkv_scale, qkv_sign, m_qkv,
      headrows, seg_ones,
      d_tmask, m_dhead, d0_tmask, ones_d, f0_tmask, ones_f)


def init_params(key, d_model=D_MODEL, d_ff=D_FF):
    import math
    ks = jax.random.split(key, 10)

    def w(k, shape):
        return jax.random.normal(k, shape, jnp.float32) * 0.02

    return {
        "wq": w(ks[0], (d_model, d_model)), "bq": w(ks[1], (1, d_model)),
        "wk": w(ks[2], (d_model, d_model)), "bk": w(ks[3], (1, d_model)),
        "wv": w(ks[4], (d_model, d_model)), "bv": w(ks[5], (1, d_model)),
        "wr": w(ks[6], (d_model, d_model)),                       # bias=False
        "w1": w(ks[7], (d_model, d_ff)),    "b1": w(ks[8], (1, d_ff)),
        "w2": w(ks[9], (d_ff, d_model)),    "b2": jnp.zeros((1, d_model), jnp.float32),
        # LorentzLinear scale params init to log(10); attention scale sqrt(d_model)
        "sq": math.log(10.0), "sk": math.log(10.0), "sv": math.log(10.0),
        "sr": math.log(10.0), "s1": math.log(10.0), "s2": math.log(10.0),
        "attn_scale": math.sqrt(d_model), "attn_bias": 0.0,
    }


def reference_forward(x, mask, params, heads=HEADS):
    """Pure-JAX reference of the same forward semantics."""
    B, T, D = x.shape
    dh = D // heads

    def proj(y, exp_scale):
        time = jax.nn.sigmoid(y[..., 0:1]) * exp_scale + 1.1
        space = y[..., 1:]
        sq = jnp.maximum(jnp.sum(space * space, -1, keepdims=True), 1e-8)
        return jnp.concatenate([time, space * jnp.sqrt((time * time - 1.0) / sq)], -1)

    def heads_proj(z, s):
        z = z.reshape(B, T, heads, dh)
        z = proj(z, jnp.exp(s))
        return z.transpose(0, 2, 1, 3)          # [B, H, T, dh]

    q = heads_proj(x @ params["wq"] + params["bq"], params["sq"])
    k = heads_proj(x @ params["wk"] + params["bk"], params["sk"])
    v = heads_proj(x @ params["wv"] + params["bv"], params["sv"])

    qn = jnp.concatenate([-q[..., 0:1], q[..., 1:]], -1)
    scores = (2.0 + 2.0 * jnp.einsum("bhqd,bhkd->bhqk", qn, k)) / params["attn_scale"] \
        + params["attn_bias"]
    scores = jnp.where(mask[:, None, :, :] > 0.0, -1e18, scores)
    p = jax.nn.softmax(scores, axis=-1)
    ave = jnp.einsum("bhqk,bhkd->bhqd", p, v)
    inner = jnp.sum(ave * ave, -1, keepdims=True) - 2.0 * ave[..., 0:1] ** 2
    ctx = ave / jnp.sqrt(jnp.maximum(jnp.abs(inner), 1e-8))
    ctx = ctx.transpose(0, 2, 1, 3).reshape(B, T, D)

    res = proj(ctx @ params["wr"] + x, jnp.exp(params["sr"]))
    h1 = proj(res @ params["w1"] + params["b1"], jnp.exp(params["s1"]))
    out = proj(h1 @ params["w2"] + params["b2"] + res, jnp.exp(params["s2"]))
    return out


if __name__ == "__main__":
    key = jax.random.PRNGKey(0)
    kx, kp = jax.random.split(key)

    x = jax.random.normal(kx, (BATCH, SEQ, D_MODEL), jnp.float32)
    lengths = jnp.array([SEQ, 5])
    pos = jnp.arange(SEQ)[None, None, :]
    mask = (pos >= lengths[:, None, None]).astype(jnp.float32)    # (B,1,T), 1.0 == pad
    params = init_params(kp)

    fwd = jax.jit(lorentz_encoder_layer)
    out = jax.block_until_ready(fwd(x, mask, params))

    ref = reference_forward(x, mask, params)
    assert out.shape == (BATCH, SEQ, D_MODEL)
    assert bool(jnp.all(jnp.isfinite(out)))
    err = float(jnp.max(jnp.abs(out - ref)))
    assert jnp.allclose(out, ref, rtol=2e-3, atol=2e-3), err
    print("KERNEL_OK")
</pallas_src>

<mosaic_0001>
module attributes {stable_mosaic.version = 11 : i64} {
  func.func @_encoder_layer_kernel(%arg0: i32, %arg1: memref<5xf32, #tpu.memory_space<smem>>, %arg2: memref<1x8x32xf32, #tpu.memory_space<vmem>>, %arg3: memref<1x1x32xf32, #tpu.memory_space<vmem>>, %arg4: memref<32x96xf32, #tpu.memory_space<vmem>>, %arg5: memref<1x96xf32, #tpu.memory_space<vmem>>, %arg6: memref<32x32xf32, #tpu.memory_space<vmem>>, %arg7: memref<32x64xf32, #tpu.memory_space<vmem>>, %arg8: memref<1x64xf32, #tpu.memory_space<vmem>>, %arg9: memref<64x32xf32, #tpu.memory_space<vmem>>, %arg10: memref<1x32xf32, #tpu.memory_space<vmem>>, %arg11: memref<1x96xf32, #tpu.memory_space<vmem>>, %arg12: memref<1x96xf32, #tpu.memory_space<vmem>>, %arg13: memref<1x96xf32, #tpu.memory_space<vmem>>, %arg14: memref<96x96xf32, #tpu.memory_space<vmem>>, %arg15: memref<32x32xf32, #tpu.memory_space<vmem>>, %arg16: memref<32x32xf32, #tpu.memory_space<vmem>>, %arg17: memref<1x32xf32, #tpu.memory_space<vmem>>, %arg18: memref<32x32xf32, #tpu.memory_space<vmem>>, %arg19: memref<1x32xf32, #tpu.memory_space<vmem>>, %arg20: memref<32x32xf32, #tpu.memory_space<vmem>>, %arg21: memref<1x64xf32, #tpu.memory_space<vmem>>, %arg22: memref<64x64xf32, #tpu.memory_space<vmem>>, %arg23: memref<1x8x32xf32, #tpu.memory_space<vmem>>) attributes {dimension_semantics = [#tpu.dimension_semantics<parallel>], iteration_bounds = array<i64: 2>, scalar_prefetch = 0 : i64, scratch_operands = 0 : i64, tpu.core_type = #tpu.core_type<tc>, window_params = [{transform_indices = @transform_0, window_bounds = array<i64: 5>}, {transform_indices = @transform_1, window_bounds = array<i64: 1, 8, 32>}, {transform_indices = @transform_2, window_bounds = array<i64: 1, 1, 32>}, {pipeline_mode = #tpu.pipeline_mode<synchronous>, transform_indices = @transform_3, window_bounds = array<i64: 32, 96>}, {pipeline_mode = #tpu.pipeline_mode<synchronous>, transform_indices = @transform_4, window_bounds = array<i64: 1, 96>}, {pipeline_mode = #tpu.pipeline_mode<synchronous>, transform_indices = @transform_5, window_bounds = array<i64: 32, 32>}, {pipeline_mode = #tpu.pipeline_mode<synchronous>, transform_indices = @transform_6, window_bounds = array<i64: 32, 64>}, {pipeline_mode = #tpu.pipeline_mode<synchronous>, transform_indices = @transform_7, window_bounds = array<i64: 1, 64>}, {pipeline_mode = #tpu.pipeline_mode<synchronous>, transform_indices = @transform_8, window_bounds = array<i64: 64, 32>}, {pipeline_mode = #tpu.pipeline_mode<synchronous>, transform_indices = @transform_9, window_bounds = array<i64: 1, 32>}, {pipeline_mode = #tpu.pipeline_mode<synchronous>, transform_indices = @transform_10, window_bounds = array<i64: 1, 96>}, {pipeline_mode = #tpu.pipeline_mode<synchronous>, transform_indices = @transform_11, window_bounds = array<i64: 1, 96>}, {pipeline_mode = #tpu.pipeline_mode<synchronous>, transform_indices = @transform_12, window_bounds = array<i64: 1, 96>}, {pipeline_mode = #tpu.pipeline_mode<synchronous>, transform_indices = @transform_13, window_bounds = array<i64: 96, 96>}, {pipeline_mode = #tpu.pipeline_mode<synchronous>, transform_indices = @transform_14, window_bounds = array<i64: 32, 32>}, {pipeline_mode = #tpu.pipeline_mode<synchronous>, transform_indices = @transform_15, window_bounds = array<i64: 32, 32>}, {pipeline_mode = #tpu.pipeline_mode<synchronous>, transform_indices = @transform_16, window_bounds = array<i64: 1, 32>}, {pipeline_mode = #tpu.pipeline_mode<synchronous>, transform_indices = @transform_17, window_bounds = array<i64: 32, 32>}, {pipeline_mode = #tpu.pipeline_mode<synchronous>, transform_indices = @transform_18, window_bounds = array<i64: 1, 32>}, {pipeline_mode = #tpu.pipeline_mode<synchronous>, transform_indices = @transform_19, window_bounds = array<i64: 32, 32>}, {pipeline_mode = #tpu.pipeline_mode<synchronous>, transform_indices = @transform_20, window_bounds = array<i64: 1, 64>}, {pipeline_mode = #tpu.pipeline_mode<synchronous>, transform_indices = @transform_21, window_bounds = array<i64: 64, 64>}, {transform_indices = @transform_22, window_bounds = array<i64: 1, 8, 32>}]} {
    %c0 = arith.constant 0 : index
    %c0_0 = arith.constant 0 : index
    %c0_1 = arith.constant 0 : index
    %0 = vector.load %arg2[%c0, %c0_0, %c0_1] : memref<1x8x32xf32, #tpu.memory_space<vmem>>, vector<1x8x32xf32>
    %1 = vector.shape_cast %0 : vector<1x8x32xf32> to vector<8x32xf32>
    %c0_2 = arith.constant 0 : index
    %2 = memref.load %arg1[%c0_2] : memref<5xf32, #tpu.memory_space<smem>>
    %c1 = arith.constant 1 : index
    %3 = memref.load %arg1[%c1] : memref<5xf32, #tpu.memory_space<smem>>
    %c2 = arith.constant 2 : index
    %4 = memref.load %arg1[%c2] : memref<5xf32, #tpu.memory_space<smem>>
    %c3 = arith.constant 3 : index
    %5 = memref.load %arg1[%c3] : memref<5xf32, #tpu.memory_space<smem>>
    %c4 = arith.constant 4 : index
    %6 = memref.load %arg1[%c4] : memref<5xf32, #tpu.memory_space<smem>>
    %c0_3 = arith.constant 0 : index
    %c0_4 = arith.constant 0 : index
    %7 = vector.load %arg4[%c0_3, %c0_4] : memref<32x96xf32, #tpu.memory_space<vmem>>, vector<32x96xf32>
    %cst = arith.constant dense<0.000000e+00> : vector<8x96xf32>
    %8 = tpu.matmul %1, %7, %cst {dimension_numbers = #tpu.dot_dimension_numbers<[1], [0], [0], [1], [0, 0, 1, 1], [], []>} : vector<8x32xf32>, vector<32x96xf32>, vector<8x96xf32> -> vector<8x96xf32>
    %c0_5 = arith.constant 0 : index
    %c0_6 = arith.constant 0 : index
    %9 = vector.load %arg5[%c0_5, %c0_6] : memref<1x96xf32, #tpu.memory_space<vmem>>, vector<1x96xf32>
    %10 = vector.broadcast %9 : vector<1x96xf32> to vector<8x96xf32>
    %11 = arith.addf %8, %10 : vector<8x96xf32>
    %c0_7 = arith.constant 0 : index
    %c0_8 = arith.constant 0 : index
    %12 = vector.load %arg11[%c0_7, %c0_8] : memref<1x96xf32, #tpu.memory_space<vmem>>, vector<1x96xf32>
    %c0_9 = arith.constant 0 : index
    %c0_10 = arith.constant 0 : index
    %13 = vector.load %arg14[%c0_9, %c0_10] : memref<96x96xf32, #tpu.memory_space<vmem>>, vector<96x96xf32>
    %c0_11 = arith.constant 0 : index
    %c0_12 = arith.constant 0 : index
    %14 = vector.load %arg12[%c0_11, %c0_12] : memref<1x96xf32, #tpu.memory_space<vmem>>, vector<1x96xf32>
    %15 = vector.broadcast %12 : vector<1x96xf32> to vector<8x96xf32>
    %16 = arith.mulf %11, %15 : vector<8x96xf32>
    %cst_13 = arith.constant dense<0.000000e+00> : vector<8x96xf32>
    %17 = tpu.matmul %16, %13, %cst_13 {dimension_numbers = #tpu.dot_dimension_numbers<[1], [0], [0], [1], [0, 0, 1, 1], [], []>} : vector<8x96xf32>, vector<96x96xf32>, vector<8x96xf32> -> vector<8x96xf32>
    %18 = arith.mulf %11, %11 : vector<8x96xf32>
    %cst_14 = arith.constant dense<0.000000e+00> : vector<8x96xf32>
    %19 = tpu.matmul %18, %13, %cst_14 {dimension_numbers = #tpu.dot_dimension_numbers<[1], [0], [0], [1], [0, 0, 1, 1], [], []>} : vector<8x96xf32>, vector<96x96xf32>, vector<8x96xf32> -> vector<8x96xf32>
    %20 = arith.mulf %17, %17 : vector<8x96xf32>
    %21 = arith.subf %19, %20 : vector<8x96xf32>
    %cst_15 = arith.constant 9.99999993E-9 : f32
    %22 = vector.broadcast %cst_15 : f32 to vector<8x96xf32>
    %23 = arith.maximumf %21, %22 : vector<8x96xf32>
    %24 = arith.negf %17 : vector<8x96xf32>
    %25 = math.exp %24 : vector<8x96xf32>
    %cst_16 = arith.constant 1.000000e+00 : f32
    %26 = vector.broadcast %cst_16 : f32 to vector<8x96xf32>
    %27 = arith.addf %26, %25 : vector<8x96xf32>
    %28 = arith.divf %26, %27 : vector<8x96xf32>
    %29 = vector.broadcast %14 : vector<1x96xf32> to vector<8x96xf32>
    %30 = arith.mulf %28, %29 : vector<8x96xf32>
    %cst_17 = arith.constant 1.100000e+00 : f32
    %31 = vector.broadcast %cst_17 : f32 to vector<8x96xf32>
    %32 = arith.addf %30, %31 : vector<8x96xf32>
    %33 = arith.mulf %32, %32 : vector<8x96xf32>
    %cst_18 = arith.constant 1.000000e+00 : f32
    %34 = vector.broadcast %cst_18 : f32 to vector<8x96xf32>
    %35 = arith.subf %33, %34 : vector<8x96xf32>
    %36 = math.sqrt %35 : vector<8x96xf32>
    %37 = math.rsqrt %23 : vector<8x96xf32>
    %38 = arith.mulf %36, %37 : vector<8x96xf32>
    %cst_19 = arith.constant 5.000000e-01 : f32
    %39 = vector.broadcast %cst_19 : f32 to vector<1x96xf32>
    %40 = arith.cmpf ogt, %12, %39 : vector<1x96xf32>
    %41 = arith.mulf %11, %38 : vector<8x96xf32>
    %42 = vector.shape_cast %40 : vector<1x96xi1> to vector<1x96xi1>
    %43 = vector.broadcast %42 : vector<1x96xi1> to vector<8x96xi1>
    %44 = arith.select %43, %32, %41 : vector<8x96xi1>, vector<8x96xf32>
    %c0_20 = arith.constant 0 : index
    %c0_21 = arith.constant 0 : index
    %45 = vector.load %arg13[%c0_20, %c0_21] : memref<1x96xf32, #tpu.memory_space<vmem>>, vector<1x96xf32>
    %46 = vector.broadcast %45 : vector<1x96xf32> to vector<8x96xf32>
    %47 = arith.mulf %44, %46 : vector<8x96xf32>
    %48 = vector.extract_strided_slice %47 {offsets = [0, 0], sizes = [8, 32], strides = [1, 1]} : vector<8x96xf32> to vector<8x32xf32>
    %49 = vector.extract_strided_slice %47 {offsets = [0, 32], sizes = [8, 32], strides = [1, 1]} : vector<8x96xf32> to vector<8x32xf32>
    %50 = vector.extract_strided_slice %47 {offsets = [0, 64], sizes = [8, 32], strides = [1, 1]} : vector<8x96xf32> to vector<8x32xf32>
    %c0_22 = arith.constant 0 : index
    %c0_23 = arith.constant 0 : index
    %51 = vector.load %arg15[%c0_22, %c0_23] : memref<32x32xf32, #tpu.memory_space<vmem>>, vector<32x32xf32>
    %52 = tpu.concatenate %49, %49, %49, %49 in 0 : vector<8x32xf32>, vector<8x32xf32>, vector<8x32xf32>, vector<8x32xf32> -> vector<32x32xf32>
    %53 = arith.mulf %52, %51 : vector<32x32xf32>
    %54 = tpu.concatenate %50, %50, %50, %50 in 0 : vector<8x32xf32>, vector<8x32xf32>, vector<8x32xf32>, vector<8x32xf32> -> vector<32x32xf32>
    %55 = arith.mulf %54, %51 : vector<32x32xf32>
    %cst_24 = arith.constant dense<0.000000e+00> : vector<8x32xf32>
    %56 = tpu.matmul %48, %53, %cst_24 {dimension_numbers = #tpu.dot_dimension_numbers<[1], [1], [0], [0], [0, 0, 1, 0], [], []>} : vector<8x32xf32>, vector<32x32xf32>, vector<8x32xf32> -> vector<8x32xf32>
    %cst_25 = arith.constant 2.000000e+00 : f32
    %57 = vector.broadcast %cst_25 : f32 to vector<8x32xf32>
    %58 = arith.mulf %57, %56 : vector<8x32xf32>
    %cst_26 = arith.constant 2.000000e+00 : f32
    %59 = vector.broadcast %cst_26 : f32 to vector<8x32xf32>
    %60 = arith.addf %59, %58 : vector<8x32xf32>
    %61 = vector.broadcast %5 : f32 to vector<8x32xf32>
    %62 = arith.mulf %60, %61 : vector<8x32xf32>
    %63 = vector.broadcast %6 : f32 to vector<8x32xf32>
    %64 = arith.addf %62, %63 : vector<8x32xf32>
    %c0_27 = arith.constant 0 : index
    %c0_28 = arith.constant 0 : index
    %c0_29 = arith.constant 0 : index
    %65 = vector.load %arg3[%c0_27, %c0_28, %c0_29] : memref<1x1x32xf32, #tpu.memory_space<vmem>>, vector<1x1x32xf32>
    %66 = vector.shape_cast %65 : vector<1x1x32xf32> to vector<1x32xf32>
    %cst_30 = arith.constant 0.000000e+00 : f32
    %67 = vector.broadcast %cst_30 : f32 to vector<1x32xf32>
    %68 = arith.cmpf ogt, %66, %67 : vector<1x32xf32>
    %cst_31 = arith.constant -9.99999984E+17 : f32
    %69 = vector.shape_cast %68 : vector<1x32xi1> to vector<1x32xi1>
    %70 = vector.broadcast %69 : vector<1x32xi1> to vector<8x32xi1>
    %71 = vector.broadcast %cst_31 : f32 to vector<8x32xf32>
    %72 = arith.select %70, %71, %64 : vector<8x32xi1>, vector<8x32xf32>
    %cst_32 = arith.constant dense<0xFF800000> : vector<8xf32>
    %73 = vector.multi_reduction <maximumf>, %72, %cst_32 [1] : vector<8x32xf32> to vector<8xf32>
    %74 = vector.shape_cast %73 : vector<8xf32> to vector<8x1xf32>
    %75 = vector.broadcast %74 : vector<8x1xf32> to vector<8x32xf32>
    %76 = arith.subf %72, %75 : vector<8x32xf32>
    %77 = math.exp %76 : vector<8x32xf32>
    %c0_33 = arith.constant 0 : index
    %c0_34 = arith.constant 0 : index
    %78 = vector.load %arg16[%c0_33, %c0_34] : memref<32x32xf32, #tpu.memory_space<vmem>>, vector<32x32xf32>
    %cst_35 = arith.constant dense<0.000000e+00> : vector<8x32xf32>
    %79 = tpu.matmul %77, %78, %cst_35 {dimension_numbers = #tpu.dot_dimension_numbers<[1], [0], [0], [1], [0, 0, 1, 1], [], []>} : vector<8x32xf32>, vector<32x32xf32>, vector<8x32xf32> -> vector<8x32xf32>
    %cst_36 = arith.constant 1.000000e-30 : f32
    %80 = vector.broadcast %cst_36 : f32 to vector<8x32xf32>
    %81 = arith.maximumf %79, %80 : vector<8x32xf32>
    %82 = tpu.reciprocal %81 {approx = true} : vector<8x32xf32> -> vector<8x32xf32>
    %83 = arith.mulf %77, %82 : vector<8x32xf32>
    %cst_37 = arith.constant dense<0.000000e+00> : vector<8x32xf32>
    %84 = tpu.matmul %83, %55, %cst_37 {dimension_numbers = #tpu.dot_dimension_numbers<[1], [0], [0], [1], [0, 0, 1, 1], [], []>} : vector<8x32xf32>, vector<32x32xf32>, vector<8x32xf32> -> vector<8x32xf32>
    %c0_38 = arith.constant 0 : index
    %c0_39 = arith.constant 0 : index
    %85 = vector.load %arg17[%c0_38, %c0_39] : memref<1x32xf32, #tpu.memory_space<vmem>>, vector<1x32xf32>
    %86 = vector.broadcast %85 : vector<1x32xf32> to vector<8x32xf32>
    %87 = arith.mulf %84, %86 : vector<8x32xf32>
    %c0_40 = arith.constant 0 : index
    %c0_41 = arith.constant 0 : index
    %88 = vector.load %arg18[%c0_40, %c0_41] : memref<32x32xf32, #tpu.memory_space<vmem>>, vector<32x32xf32>
    %cst_42 = arith.constant dense<0.000000e+00> : vector<8x32xf32>
    %89 = tpu.matmul %87, %88, %cst_42 {dimension_numbers = #tpu.dot_dimension_numbers<[1], [0], [0], [1], [0, 0, 1, 1], [], []>} : vector<8x32xf32>, vector<32x32xf32>, vector<8x32xf32> -> vector<8x32xf32>
    %90 = arith.mulf %84, %84 : vector<8x32xf32>
    %c0_43 = arith.constant 0 : index
    %c0_44 = arith.constant 0 : index
    %91 = vector.load %arg18[%c0_43, %c0_44] : memref<32x32xf32, #tpu.memory_space<vmem>>, vector<32x32xf32>
    %cst_45 = arith.constant dense<0.000000e+00> : vector<8x32xf32>
    %92 = tpu.matmul %90, %91, %cst_45 {dimension_numbers = #tpu.dot_dimension_numbers<[1], [0], [0], [1], [0, 0, 1, 1], [], []>} : vector<8x32xf32>, vector<32x32xf32>, vector<8x32xf32> -> vector<8x32xf32>
    %cst_46 = arith.constant 2.000000e+00 : f32
    %93 = vector.broadcast %cst_46 : f32 to vector<8x32xf32>
    %94 = arith.mulf %93, %89 : vector<8x32xf32>
    %95 = arith.mulf %94, %89 : vector<8x32xf32>
    %96 = arith.subf %92, %95 : vector<8x32xf32>
    %97 = math.absf %96 : vector<8x32xf32>
    %cst_47 = arith.constant 9.99999993E-9 : f32
    %98 = vector.broadcast %cst_47 : f32 to vector<8x32xf32>
    %99 = arith.maximumf %97, %98 : vector<8x32xf32>
    %100 = math.rsqrt %99 : vector<8x32xf32>
    %101 = arith.mulf %84, %100 : vector<8x32xf32>
    %c0_48 = arith.constant 0 : index
    %c0_49 = arith.constant 0 : index
    %102 = vector.load %arg19[%c0_48, %c0_49] : memref<1x32xf32, #tpu.memory_space<vmem>>, vector<1x32xf32>
    %c0_50 = arith.constant 0 : index
    %c0_51 = arith.constant 0 : index
    %103 = vector.load %arg20[%c0_50, %c0_51] : memref<32x32xf32, #tpu.memory_space<vmem>>, vector<32x32xf32>
    %c0_52 = arith.constant 0 : index
    %c0_53 = arith.constant 0 : index
    %104 = vector.load %arg6[%c0_52, %c0_53] : memref<32x32xf32, #tpu.memory_space<vmem>>, vector<32x32xf32>
    %cst_54 = arith.constant dense<0.000000e+00> : vector<8x32xf32>
    %105 = tpu.matmul %101, %104, %cst_54 {dimension_numbers = #tpu.dot_dimension_numbers<[1], [0], [0], [1], [0, 0, 1, 1], [], []>} : vector<8x32xf32>, vector<32x32xf32>, vector<8x32xf32> -> vector<8x32xf32>
    %106 = arith.addf %105, %1 : vector<8x32xf32>
    %107 = vector.broadcast %102 : vector<1x32xf32> to vector<8x32xf32>
    %108 = arith.mulf %106, %107 : vector<8x32xf32>
    %cst_55 = arith.constant dense<0.000000e+00> : vector<8x32xf32>
    %109 = tpu.matmul %108, %103, %cst_55 {dimension_numbers = #tpu.dot_dimension_numbers<[1], [0], [0], [1], [0, 0, 1, 1], [], []>} : vector<8x32xf32>, vector<32x32xf32>, vector<8x32xf32> -> vector<8x32xf32>
    %110 = arith.mulf %106, %106 : vector<8x32xf32>
    %cst_56 = arith.constant dense<0.000000e+00> : vector<8x32xf32>
    %111 = tpu.matmul %110, %103, %cst_56 {dimension_numbers = #tpu.dot_dimension_numbers<[1], [0], [0], [1], [0, 0, 1, 1], [], []>} : vector<8x32xf32>, vector<32x32xf32>, vector<8x32xf32> -> vector<8x32xf32>
    %112 = arith.mulf %109, %109 : vector<8x32xf32>
    %113 = arith.subf %111, %112 : vector<8x32xf32>
    %cst_57 = arith.constant 9.99999993E-9 : f32
    %114 = vector.broadcast %cst_57 : f32 to vector<8x32xf32>
    %115 = arith.maximumf %113, %114 : vector<8x32xf32>
    %116 = arith.negf %109 : vector<8x32xf32>
    %117 = math.exp %116 : vector<8x32xf32>
    %cst_58 = arith.constant 1.000000e+00 : f32
    %118 = vector.broadcast %cst_58 : f32 to vector<8x32xf32>
    %119 = arith.addf %118, %117 : vector<8x32xf32>
    %120 = arith.divf %118, %119 : vector<8x32xf32>
    %121 = vector.broadcast %2 : f32 to vector<8x32xf32>
    %122 = arith.mulf %120, %121 : vector<8x32xf32>
    %cst_59 = arith.constant 1.100000e+00 : f32
    %123 = vector.broadcast %cst_59 : f32 to vector<8x32xf32>
    %124 = arith.addf %122, %123 : vector<8x32xf32>
    %125 = arith.mulf %124, %124 : vector<8x32xf32>
    %cst_60 = arith.constant 1.000000e+00 : f32
    %126 = vector.broadcast %cst_60 : f32 to vector<8x32xf32>
    %127 = arith.subf %125, %126 : vector<8x32xf32>
    %128 = math.sqrt %127 : vector<8x32xf32>
    %129 = math.rsqrt %115 : vector<8x32xf32>
    %130 = arith.mulf %128, %129 : vector<8x32xf32>
    %cst_61 = arith.constant 5.000000e-01 : f32
    %131 = vector.broadcast %cst_61 : f32 to vector<1x32xf32>
    %132 = arith.cmpf ogt, %102, %131 : vector<1x32xf32>
    %133 = arith.mulf %106, %130 : vector<8x32xf32>
    %134 = vector.shape_cast %132 : vector<1x32xi1> to vector<1x32xi1>
    %135 = vector.broadcast %134 : vector<1x32xi1> to vector<8x32xi1>
    %136 = arith.select %135, %124, %133 : vector<8x32xi1>, vector<8x32xf32>
    %c0_62 = arith.constant 0 : index
    %c0_63 = arith.constant 0 : index
    %137 = vector.load %arg7[%c0_62, %c0_63] : memref<32x64xf32, #tpu.memory_space<vmem>>, vector<32x64xf32>
    %cst_64 = arith.constant dense<0.000000e+00> : vector<8x64xf32>
    %138 = tpu.matmul %136, %137, %cst_64 {dimension_numbers = #tpu.dot_dimension_numbers<[1], [0], [0], [1], [0, 0, 1, 1], [], []>} : vector<8x32xf32>, vector<32x64xf32>, vector<8x64xf32> -> vector<8x64xf32>
    %c0_65 = arith.constant 0 : index
    %c0_66 = arith.constant 0 : index
    %139 = vector.load %arg8[%c0_65, %c0_66] : memref<1x64xf32, #tpu.memory_space<vmem>>, vector<1x64xf32>
    %140 = vector.broadcast %139 : vector<1x64xf32> to vector<8x64xf32>
    %141 = arith.addf %138, %140 : vector<8x64xf32>
    %c0_67 = arith.constant 0 : index
    %c0_68 = arith.constant 0 : index
    %142 = vector.load %arg21[%c0_67, %c0_68] : memref<1x64xf32, #tpu.memory_space<vmem>>, vector<1x64xf32>
    %c0_69 = arith.constant 0 : index
    %c0_70 = arith.constant 0 : index
    %143 = vector.load %arg22[%c0_69, %c0_70] : memref<64x64xf32, #tpu.memory_space<vmem>>, vector<64x64xf32>
    %144 = vector.broadcast %142 : vector<1x64xf32> to vector<8x64xf32>
    %145 = arith.mulf %141, %144 : vector<8x64xf32>
    %cst_71 = arith.constant dense<0.000000e+00> : vector<8x64xf32>
    %146 = tpu.matmul %145, %143, %cst_71 {dimension_numbers = #tpu.dot_dimension_numbers<[1], [0], [0], [1], [0, 0, 1, 1], [], []>} : vector<8x64xf32>, vector<64x64xf32>, vector<8x64xf32> -> vector<8x64xf32>
    %147 = arith.mulf %141, %141 : vector<8x64xf32>
    %cst_72 = arith.constant dense<0.000000e+00> : vector<8x64xf32>
    %148 = tpu.matmul %147, %143, %cst_72 {dimension_numbers = #tpu.dot_dimension_numbers<[1], [0], [0], [1], [0, 0, 1, 1], [], []>} : vector<8x64xf32>, vector<64x64xf32>, vector<8x64xf32> -> vector<8x64xf32>
    %149 = arith.mulf %146, %146 : vector<8x64xf32>
    %150 = arith.subf %148, %149 : vector<8x64xf32>
    %cst_73 = arith.constant 9.99999993E-9 : f32
    %151 = vector.broadcast %cst_73 : f32 to vector<8x64xf32>
    %152 = arith.maximumf %150, %151 : vector<8x64xf32>
    %153 = arith.negf %146 : vector<8x64xf32>
    %154 = math.exp %153 : vector<8x64xf32>
    %cst_74 = arith.constant 1.000000e+00 : f32
    %155 = vector.broadcast %cst_74 : f32 to vector<8x64xf32>
    %156 = arith.addf %155, %154 : vector<8x64xf32>
    %157 = arith.divf %155, %156 : vector<8x64xf32>
    %158 = vector.broadcast %3 : f32 to vector<8x64xf32>
    %159 = arith.mulf %157, %158 : vector<8x64xf32>
    %cst_75 = arith.constant 1.100000e+00 : f32
    %160 = vector.broadcast %cst_75 : f32 to vector<8x64xf32>
    %161 = arith.addf %159, %160 : vector<8x64xf32>
    %162 = arith.mulf %161, %161 : vector<8x64xf32>
    %cst_76 = arith.constant 1.000000e+00 : f32
    %163 = vector.broadcast %cst_76 : f32 to vector<8x64xf32>
    %164 = arith.subf %162, %163 : vector<8x64xf32>
    %165 = math.sqrt %164 : vector<8x64xf32>
    %166 = math.rsqrt %152 : vector<8x64xf32>
    %167 = arith.mulf %165, %166 : vector<8x64xf32>
    %cst_77 = arith.constant 5.000000e-01 : f32
    %168 = vector.broadcast %cst_77 : f32 to vector<1x64xf32>
    %169 = arith.cmpf ogt, %142, %168 : vector<1x64xf32>
    %170 = arith.mulf %141, %167 : vector<8x64xf32>
    %171 = vector.shape_cast %169 : vector<1x64xi1> to vector<1x64xi1>
    %172 = vector.broadcast %171 : vector<1x64xi1> to vector<8x64xi1>
    %173 = arith.select %172, %161, %170 : vector<8x64xi1>, vector<8x64xf32>
    %c0_78 = arith.constant 0 : index
    %c0_79 = arith.constant 0 : index
    %174 = vector.load %arg9[%c0_78, %c0_79] : memref<64x32xf32, #tpu.memory_space<vmem>>, vector<64x32xf32>
    %cst_80 = arith.constant dense<0.000000e+00> : vector<8x32xf32>
    %175 = tpu.matmul %173, %174, %cst_80 {dimension_numbers = #tpu.dot_dimension_numbers<[1], [0], [0], [1], [0, 0, 1, 1], [], []>} : vector<8x64xf32>, vector<64x32xf32>, vector<8x32xf32> -> vector<8x32xf32>
    %c0_81 = arith.constant 0 : index
    %c0_82 = arith.constant 0 : index
    %176 = vector.load %arg10[%c0_81, %c0_82] : memref<1x32xf32, #tpu.memory_space<vmem>>, vector<1x32xf32>
    %177 = vector.broadcast %176 : vector<1x32xf32> to vector<8x32xf32>
    %178 = arith.addf %175, %177 : vector<8x32xf32>
    %179 = arith.addf %178, %136 : vector<8x32xf32>
    %180 = vector.broadcast %102 : vector<1x32xf32> to vector<8x32xf32>
    %181 = arith.mulf %179, %180 : vector<8x32xf32>
    %cst_83 = arith.constant dense<0.000000e+00> : vector<8x32xf32>
    %182 = tpu.matmul %181, %103, %cst_83 {dimension_numbers = #tpu.dot_dimension_numbers<[1], [0], [0], [1], [0, 0, 1, 1], [], []>} : vector<8x32xf32>, vector<32x32xf32>, vector<8x32xf32> -> vector<8x32xf32>
    %183 = arith.mulf %179, %179 : vector<8x32xf32>
    %cst_84 = arith.constant dense<0.000000e+00> : vector<8x32xf32>
    %184 = tpu.matmul %183, %103, %cst_84 {dimension_numbers = #tpu.dot_dimension_numbers<[1], [0], [0], [1], [0, 0, 1, 1], [], []>} : vector<8x32xf32>, vector<32x32xf32>, vector<8x32xf32> -> vector<8x32xf32>
    %185 = arith.mulf %182, %182 : vector<8x32xf32>
    %186 = arith.subf %184, %185 : vector<8x32xf32>
    %cst_85 = arith.constant 9.99999993E-9 : f32
    %187 = vector.broadcast %cst_85 : f32 to vector<8x32xf32>
    %188 = arith.maximumf %186, %187 : vector<8x32xf32>
    %189 = arith.negf %182 : vector<8x32xf32>
    %190 = math.exp %189 : vector<8x32xf32>
    %cst_86 = arith.constant 1.000000e+00 : f32
    %191 = vector.broadcast %cst_86 : f32 to vector<8x32xf32>
    %192 = arith.addf %191, %190 : vector<8x32xf32>
    %193 = arith.divf %191, %192 : vector<8x32xf32>
    %194 = vector.broadcast %4 : f32 to vector<8x32xf32>
    %195 = arith.mulf %193, %194 : vector<8x32xf32>
    %cst_87 = arith.constant 1.100000e+00 : f32
    %196 = vector.broadcast %cst_87 : f32 to vector<8x32xf32>
    %197 = arith.addf %195, %196 : vector<8x32xf32>
    %198 = arith.mulf %197, %197 : vector<8x32xf32>
    %cst_88 = arith.constant 1.000000e+00 : f32
    %199 = vector.broadcast %cst_88 : f32 to vector<8x32xf32>
    %200 = arith.subf %198, %199 : vector<8x32xf32>
    %201 = math.sqrt %200 : vector<8x32xf32>
    %202 = math.rsqrt %188 : vector<8x32xf32>
    %203 = arith.mulf %201, %202 : vector<8x32xf32>
    %cst_89 = arith.constant 5.000000e-01 : f32
    %204 = vector.broadcast %cst_89 : f32 to vector<1x32xf32>
    %205 = arith.cmpf ogt, %102, %204 : vector<1x32xf32>
    %206 = arith.mulf %179, %203 : vector<8x32xf32>
    %207 = vector.shape_cast %205 : vector<1x32xi1> to vector<1x32xi1>
    %208 = vector.broadcast %207 : vector<1x32xi1> to vector<8x32xi1>
    %209 = arith.select %208, %197, %206 : vector<8x32xi1>, vector<8x32xf32>
    %c0_90 = arith.constant 0 : index
    %c0_91 = arith.constant 0 : index
    %c0_92 = arith.constant 0 : index
    %210 = vector.load %arg23[%c0_90, %c0_91, %c0_92] : memref<1x8x32xf32, #tpu.memory_space<vmem>>, vector<1x8x32xf32>
    %211 = vector.shape_cast %210 : vector<1x8x32xf32> to vector<8x32xf32>
    %212 = vector.shape_cast %209 : vector<8x32xf32> to vector<1x8x32xf32>
    tpu.vector_store %arg23[%c0_90, %c0_91, %c0_92], %212 {strides = array<i32>} : memref<1x8x32xf32, #tpu.memory_space<vmem>>, vector<1x8x32xf32>,
    return
  }
  func.func @transform_0(%arg0: i32) -> i32 {
    %c0_i32 = arith.constant 0 : i32
    %c0_i32_0 = arith.constant 0 : i32
    return %c0_i32 : i32
  }
  func.func @transform_1(%arg0: i32) -> (i32, i32, i32) {
    %c0_i32 = arith.constant 0 : i32
    %c0_i32_0 = arith.constant 0 : i32
    %c0_i32_1 = arith.constant 0 : i32
    return %arg0, %c0_i32, %c0_i32_0 : i32, i32, i32
  }
  func.func @transform_2(%arg0: i32) -> (i32, i32, i32) {
    %c0_i32 = arith.constant 0 : i32
    %c0_i32_0 = arith.constant 0 : i32
    %c0_i32_1 = arith.constant 0 : i32
    return %arg0, %c0_i32, %c0_i32_0 : i32, i32, i32
  }
  func.func @transform_3(%arg0: i32) -> (i32, i32) {
    %c0_i32 = arith.constant 0 : i32
    %c0_i32_0 = arith.constant 0 : i32
    %c0_i32_1 = arith.constant 0 : i32
    return %c0_i32, %c0_i32_0 : i32, i32
  }
  func.func @transform_4(%arg0: i32) -> (i32, i32) {
    %c0_i32 = arith.constant 0 : i32
    %c0_i32_0 = arith.constant 0 : i32
    %c0_i32_1 = arith.constant 0 : i32
    return %c0_i32, %c0_i32_0 : i32, i32
  }
  func.func @transform_5(%arg0: i32) -> (i32, i32) {
    %c0_i32 = arith.constant 0 : i32
    %c0_i32_0 = arith.constant 0 : i32
    %c0_i32_1 = arith.constant 0 : i32
    return %c0_i32, %c0_i32_0 : i32, i32
  }
  func.func @transform_6(%arg0: i32) -> (i32, i32) {
    %c0_i32 = arith.constant 0 : i32
    %c0_i32_0 = arith.constant 0 : i32
    %c0_i32_1 = arith.constant 0 : i32
    return %c0_i32, %c0_i32_0 : i32, i32
  }
  func.func @transform_7(%arg0: i32) -> (i32, i32) {
    %c0_i32 = arith.constant 0 : i32
    %c0_i32_0 = arith.constant 0 : i32
    %c0_i32_1 = arith.constant 0 : i32
    return %c0_i32, %c0_i32_0 : i32, i32
  }
  func.func @transform_8(%arg0: i32) -> (i32, i32) {
    %c0_i32 = arith.constant 0 : i32
    %c0_i32_0 = arith.constant 0 : i32
    %c0_i32_1 = arith.constant 0 : i32
    return %c0_i32, %c0_i32_0 : i32, i32
  }
  func.func @transform_9(%arg0: i32) -> (i32, i32) {
    %c0_i32 = arith.constant 0 : i32
    %c0_i32_0 = arith.constant 0 : i32
    %c0_i32_1 = arith.constant 0 : i32
    return %c0_i32, %c0_i32_0 : i32, i32
  }
  func.func @transform_10(%arg0: i32) -> (i32, i32) {
    %c0_i32 = arith.constant 0 : i32
    %c0_i32_0 = arith.constant 0 : i32
    %c0_i32_1 = arith.constant 0 : i32
    return %c0_i32, %c0_i32_0 : i32, i32
  }
  func.func @transform_11(%arg0: i32) -> (i32, i32) {
    %c0_i32 = arith.constant 0 : i32
    %c0_i32_0 = arith.constant 0 : i32
    %c0_i32_1 = arith.constant 0 : i32
    return %c0_i32, %c0_i32_0 : i32, i32
  }
  func.func @transform_12(%arg0: i32) -> (i32, i32) {
    %c0_i32 = arith.constant 0 : i32
    %c0_i32_0 = arith.constant 0 : i32
    %c0_i32_1 = arith.constant 0 : i32
    return %c0_i32, %c0_i32_0 : i32, i32
  }
  func.func @transform_13(%arg0: i32) -> (i32, i32) {
    %c0_i32 = arith.constant 0 : i32
    %c0_i32_0 = arith.constant 0 : i32
    %c0_i32_1 = arith.constant 0 : i32
    return %c0_i32, %c0_i32_0 : i32, i32
  }
  func.func @transform_14(%arg0: i32) -> (i32, i32) {
    %c0_i32 = arith.constant 0 : i32
    %c0_i32_0 = arith.constant 0 : i32
    %c0_i32_1 = arith.constant 0 : i32
    return %c0_i32, %c0_i32_0 : i32, i32
  }
  func.func @transform_15(%arg0: i32) -> (i32, i32) {
    %c0_i32 = arith.constant 0 : i32
    %c0_i32_0 = arith.constant 0 : i32
    %c0_i32_1 = arith.constant 0 : i32
    return %c0_i32, %c0_i32_0 : i32, i32
  }
  func.func @transform_16(%arg0: i32) -> (i32, i32) {
    %c0_i32 = arith.constant 0 : i32
    %c0_i32_0 = arith.constant 0 : i32
    %c0_i32_1 = arith.constant 0 : i32
    return %c0_i32, %c0_i32_0 : i32, i32
  }
  func.func @transform_17(%arg0: i32) -> (i32, i32) {
    %c0_i32 = arith.constant 0 : i32
    %c0_i32_0 = arith.constant 0 : i32
    %c0_i32_1 = arith.constant 0 : i32
    return %c0_i32, %c0_i32_0 : i32, i32
  }
  func.func @transform_18(%arg0: i32) -> (i32, i32) {
    %c0_i32 = arith.constant 0 : i32
    %c0_i32_0 = arith.constant 0 : i32
    %c0_i32_1 = arith.constant 0 : i32
    return %c0_i32, %c0_i32_0 : i32, i32
  }
  func.func @transform_19(%arg0: i32) -> (i32, i32) {
    %c0_i32 = arith.constant 0 : i32
    %c0_i32_0 = arith.constant 0 : i32
    %c0_i32_1 = arith.constant 0 : i32
    return %c0_i32, %c0_i32_0 : i32, i32
  }
  func.func @transform_20(%arg0: i32) -> (i32, i32) {
    %c0_i32 = arith.constant 0 : i32
    %c0_i32_0 = arith.constant 0 : i32
    %c0_i32_1 = arith.constant 0 : i32
    return %c0_i32, %c0_i32_0 : i32, i32
  }
  func.func @transform_21(%arg0: i32) -> (i32, i32) {
    %c0_i32 = arith.constant 0 : i32
    %c0_i32_0 = arith.constant 0 : i32
    %c0_i32_1 = arith.constant 0 : i32
    return %c0_i32, %c0_i32_0 : i32, i32
  }
  func.func @transform_22(%arg0: i32) -> (i32, i32, i32) {
    %c0_i32 = arith.constant 0 : i32
    %c0_i32_0 = arith.constant 0 : i32
    %c0_i32_1 = arith.constant 0 : i32
    return %arg0, %c0_i32, %c0_i32_0 : i32, i32, i32
  }
}

</mosaic_0001>

<llo_original>
// kernel: lorentz_encoder_layer.1
$region0: #{lorentz_encoder_layer.1}
  #allocation0 [shape = 'u32[]', space=smem, size = 0x4, offset = 0x4, fixed_abs, tag = 'smem constant byte address 0x4 - core index']
  #allocation1 [shape = 'u32[144,128]{1,0:T(1,128)}', space=vmem, size = 0x12000, scoped, tag = 'internal scratch']
  %s0 = inlined_call_operand.vmem [shape: f32[5], index: 0, kind: input, shape index: {}]
  %s1 = inlined_call_operand.vmem [shape: f32[2,8,32], index: 1, kind: input, shape index: {}]
  %s2 = inlined_call_operand.vmem [shape: f32[2,1,32], index: 2, kind: input, shape index: {}]
  %s3 = inlined_call_operand.vmem [shape: f32[32,96], index: 3, kind: input, shape index: {}]
  %s4 = inlined_call_operand.vmem [shape: f32[1,96], index: 4, kind: input, shape index: {}]
  %s5 = inlined_call_operand.vmem [shape: f32[32,32], index: 5, kind: input, shape index: {}]
  %s6 = inlined_call_operand.vmem [shape: f32[32,64], index: 6, kind: input, shape index: {}]
  %s7 = inlined_call_operand.vmem [shape: f32[1,64], index: 7, kind: input, shape index: {}]
  %s8 = inlined_call_operand.vmem [shape: f32[64,32], index: 8, kind: input, shape index: {}]
  %s9 = inlined_call_operand.vmem [shape: f32[1,32], index: 9, kind: input, shape index: {}]
  %s10 = inlined_call_operand.vmem [shape: f32[1,96], index: 10, kind: input, shape index: {}]
  %s11 = inlined_call_operand.vmem [shape: f32[1,96], index: 11, kind: input, shape index: {}]
  %s12 = inlined_call_operand.vmem [shape: f32[1,96], index: 12, kind: input, shape index: {}]
  %s13 = inlined_call_operand.vmem [shape: f32[96,96], index: 13, kind: input, shape index: {}]
  %s14 = inlined_call_operand.vmem [shape: f32[32,32], index: 14, kind: input, shape index: {}, may-alias: {14,15,17}]
  %s15 = inlined_call_operand.vmem [shape: f32[32,32], index: 15, kind: input, shape index: {}, may-alias: {14,15,17}]
  %s16 = inlined_call_operand.vmem [shape: f32[1,32], index: 16, kind: input, shape index: {}]
  %s17 = inlined_call_operand.vmem [shape: f32[32,32], index: 17, kind: input, shape index: {}, may-alias: {14,15,17}]
  %s18 = inlined_call_operand.vmem [shape: f32[1,32], index: 18, kind: input, shape index: {}]
  %s19 = inlined_call_operand.vmem [shape: f32[32,32], index: 19, kind: input, shape index: {}]
  %s20 = inlined_call_operand.vmem [shape: f32[1,64], index: 20, kind: input, shape index: {}]
  %s21 = inlined_call_operand.vmem [shape: f32[64,64], index: 21, kind: input, shape index: {}]
  %s22 = inlined_call_operand.hbm [shape: f32[2,8,32], index: 22, kind: output, shape index: {}]
  %s23 = sld [smem:[#allocation0]]
  $region125: #{lorentz_encoder_layer.1} parent=0
    _
  %s25 = ssub.s32 1, %s23
  %s26 = scalar_select 0, %s25, %s23
  $region1: #{lorentz_encoder_layer.1} parent=0
    #allocation2 [shape = 'u8[512]{0}', space=smem, size = 0x200, scoped, tag = 'input window, operand 0, single buffered']
    #allocation3 [shape = 's32[2]{0}', space=sflag, size = 0x8, scoped, tag = 'scoped memory for lorentz_encoder_layer.1']
    #allocation4 [shape = 's32[2]{0}', space=sflag, size = 0x8, scoped, tag = 'scoped memory for lorentz_encoder_layer.1']
    #allocation5 [shape = 'u8[8192]{0}', space=vmem, size = 0x2000, scoped, tag = 'output window, operand 0']
    %27 = vsyncpa [#allocation4], 0
    %28 = vsyncpa [#allocation3], 0
    %s29 = scalar_lea.sflag [#allocation3], 1
    %30 = vsyncpa %s29, 0
    loop: start=0, step=1, limit=4
    $region2: #{lorentz_encoder_layer.1} parent=1 // loop_pre_header
      _
    $region3: #{lorentz_encoder_layer.1} parent=1 // loop_header
      %s32 = sphi 0, %s36
      %p33 = scmp.ge.s32.totalorder %s32, 4
      %s40 = sphi 0, %s40
      %s42 = sphi 0, %s40
      %s43 = sphi 0, %s42
      %s57 = sphi 0, %s43
      %s63 = sphi 0, %s65
      %s66 = sphi 0, %s63
      %s67 = sphi 0, %s66
      %s83 = sphi 0, %s67
      %s89 = sphi 0, %s91
      %s92 = sphi 0, %s89
      %s93 = sphi 0, %s92
      %s109 = sphi 0, %s93
      %s113 = sphi 0, %s113
      %s115 = sphi 0, %s113
      %s116 = sphi 0, %s115
      %s130 = sphi 0, %s116
      %s134 = sphi 0, %s134
      %s136 = sphi 0, %s134
      %s137 = sphi 0, %s136
      %s151 = sphi 0, %s137
      %s155 = sphi 0, %s155
      %s157 = sphi 0, %s155
      %s158 = sphi 0, %s157
      %s172 = sphi 0, %s158
      %s176 = sphi 0, %s176
      %s178 = sphi 0, %s176
      %s179 = sphi 0, %s178
      %s193 = sphi 0, %s179
      %s197 = sphi 0, %s197
      %s199 = sphi 0, %s197
      %s200 = sphi 0, %s199
      %s214 = sphi 0, %s200
      %s218 = sphi 0, %s218
      %s220 = sphi 0, %s218
      %s221 = sphi 0, %s220
      %s235 = sphi 0, %s221
      %s239 = sphi 0, %s239
      %s241 = sphi 0, %s239
      %s242 = sphi 0, %s241
      %s256 = sphi 0, %s242
      %s260 = sphi 0, %s260
      %s262 = sphi 0, %s260
      %s263 = sphi 0, %s262
      %s277 = sphi 0, %s263
      %s281 = sphi 0, %s281
      %s283 = sphi 0, %s281
      %s284 = sphi 0, %s283
      %s298 = sphi 0, %s284
      %s302 = sphi 0, %s302
      %s304 = sphi 0, %s302
      %s305 = sphi 0, %s304
      %s319 = sphi 0, %s305
      %s323 = sphi 0, %s323
      %s325 = sphi 0, %s323
      %s326 = sphi 0, %s325
      %s340 = sphi 0, %s326
      %s344 = sphi 0, %s344
      %s346 = sphi 0, %s344
      %s347 = sphi 0, %s346
      %s361 = sphi 0, %s347
      %s365 = sphi 0, %s365
      %s367 = sphi 0, %s365
      %s368 = sphi 0, %s367
      %s382 = sphi 0, %s368
      %s386 = sphi 0, %s386
      %s388 = sphi 0, %s386
      %s389 = sphi 0, %s388
      %s403 = sphi 0, %s389
      %s407 = sphi 0, %s407
      %s409 = sphi 0, %s407
      %s410 = sphi 0, %s409
      %s424 = sphi 0, %s410
      %s428 = sphi 0, %s428
      %s430 = sphi 0, %s428
      %s431 = sphi 0, %s430
      %s445 = sphi 0, %s431
      %s449 = sphi 0, %s449
      %s451 = sphi 0, %s449
      %s452 = sphi 0, %s451
      %s466 = sphi 0, %s452
      %s470 = sphi 0, %s470
      %s472 = sphi 0, %s470
      %s473 = sphi 0, %s472
      %s487 = sphi 0, %s473
      %s491 = sphi 0, %s491
      %s493 = sphi 0, %s491
      %s494 = sphi 0, %s493
      %s508 = sphi 0, %s494
      %s514 = sphi 0, %s516
      %s517 = sphi 0, %s514
      %s518 = sphi 0, %s517
      %s534 = sphi 0, %s518
    $region4: #{lorentz_encoder_layer.1} parent=1 // loop_header_branch
      %35 = sbr.rel (%p33) target = $region8
    $region5: #{lorentz_encoder_layer.1} parent=1 // loop_body
      %s37 = ssub.s32 %s32, 1
      %s38 = ssub.s32 %s32, 2
      %s39 = sadd.s32 %s32, 1
      %s41 = sadd.s32 %s40, 1
      %p44 = scmp.eq.s32.totalorder %s32, 1
      %p45 = scmp.ne.s32.totalorder %s40, %s42
      %p46 = scmp.eq.s32.totalorder %s32, 0
      %p47 = por %p45, %p46
      %p48 = scmp.ne.s32.totalorder %s40, %s42
      %p49 = scmp.eq.s32.totalorder %s37, 1
      %p50 = por %p48, %p49
      %p51 = scmp.ne.s32.totalorder %s42, %s43
      %p52 = scmp.eq.s32.totalorder %s37, 0
      %p53 = por %p51, %p52
      %p54 = scmp.ne.s32.totalorder %s42, %s43
      %p55 = scmp.eq.s32.totalorder %s38, 1
      %p56 = por %p54, %p55
      %p58 = scmp.ne.s32.totalorder %s43, %s57
      %p59 = scmp.eq.s32.totalorder %s38, 0
      %p60 = por %p58, %p59
      %s61 = ssub.s32 %s32, %s39
      %p62 = scmp.eq.s32.totalorder %s61, 0
      %s64 = sadd.s32 %s63, 1
      %s65 = scalar_select %p62, %s63, %s64
      %p68 = pneg %p62
      %p69 = scmp.eq.s32.totalorder %s32, 1
      %p70 = por %p68, %p69
      %p71 = scmp.ne.s32.totalorder %s63, %s66
      %p72 = scmp.eq.s32.totalorder %s32, 0
      %p73 = por %p71, %p72
      %p74 = scmp.ne.s32.totalorder %s63, %s66
      %p75 = scmp.eq.s32.totalorder %s37, 1
      %p76 = por %p74, %p75
      %p77 = scmp.ne.s32.totalorder %s66, %s67
      %p78 = scmp.eq.s32.totalorder %s37, 0
      %p79 = por %p77, %p78
      %p80 = scmp.ne.s32.totalorder %s66, %s67
      %p81 = scmp.eq.s32.totalorder %s38, 1
      %p82 = por %p80, %p81
      %p84 = scmp.ne.s32.totalorder %s67, %s83
      %p85 = scmp.eq.s32.totalorder %s38, 0
      %p86 = por %p84, %p85
      %s87 = ssub.s32 %s32, %s39
      %p88 = scmp.eq.s32.totalorder %s87, 0
      %s90 = sadd.s32 %s89, 1
      %s91 = scalar_select %p88, %s89, %s90
      %p94 = pneg %p88
      %p95 = scmp.eq.s32.totalorder %s32, 1
      %p96 = por %p94, %p95
      %p97 = scmp.ne.s32.totalorder %s89, %s92
      %p98 = scmp.eq.s32.totalorder %s32, 0
      %p99 = por %p97, %p98
      %p100 = scmp.ne.s32.totalorder %s89, %s92
      %p101 = scmp.eq.s32.totalorder %s37, 1
      %p102 = por %p100, %p101
      %p103 = scmp.ne.s32.totalorder %s92, %s93
      %p104 = scmp.eq.s32.totalorder %s37, 0
      %p105 = por %p103, %p104
      %p106 = scmp.ne.s32.totalorder %s92, %s93
      %p107 = scmp.eq.s32.totalorder %s38, 1
      %p108 = por %p106, %p107
      %p110 = scmp.ne.s32.totalorder %s93, %s109
      %p111 = scmp.eq.s32.totalorder %s38, 0
      %p112 = por %p110, %p111
      %s114 = sadd.s32 %s113, 1
      %p117 = scmp.eq.s32.totalorder %s32, 1
      %p118 = scmp.ne.s32.totalorder %s113, %s115
      %p119 = scmp.eq.s32.totalorder %s32, 0
      %p120 = por %p118, %p119
      %p121 = scmp.ne.s32.totalorder %s113, %s115
      %p122 = scmp.eq.s32.totalorder %s37, 1
      %p123 = por %p121, %p122
      %p124 = scmp.ne.s32.totalorder %s115, %s116
      %p125 = scmp.eq.s32.totalorder %s37, 0
      %p126 = por %p124, %p125
      %p127 = scmp.ne.s32.totalorder %s115, %s116
      %p128 = scmp.eq.s32.totalorder %s38, 1
      %p129 = por %p127, %p128
      %p131 = scmp.ne.s32.totalorder %s116, %s130
      %p132 = scmp.eq.s32.totalorder %s38, 0
      %p133 = por %p131, %p132
      %s135 = sadd.s32 %s134, 1
      %p138 = scmp.eq.s32.totalorder %s32, 1
      %p139 = scmp.ne.s32.totalorder %s134, %s136
      %p140 = scmp.eq.s32.totalorder %s32, 0
      %p141 = por %p139, %p140
      %p142 = scmp.ne.s32.totalorder %s134, %s136
      %p143 = scmp.eq.s32.totalorder %s37, 1
      %p144 = por %p142, %p143
      %p145 = scmp.ne.s32.totalorder %s136, %s137
      %p146 = scmp.eq.s32.totalorder %s37, 0
      %p147 = por %p145, %p146
      %p148 = scmp.ne.s32.totalorder %s136, %s137
      %p149 = scmp.eq.s32.totalorder %s38, 1
      %p150 = por %p148, %p149
      %p152 = scmp.ne.s32.totalorder %s137, %s151
      %p153 = scmp.eq.s32.totalorder %s38, 0
      %p154 = por %p152, %p153
      %s156 = sadd.s32 %s155, 1
      %p159 = scmp.eq.s32.totalorder %s32, 1
      %p160 = scmp.ne.s32.totalorder %s155, %s157
      %p161 = scmp.eq.s32.totalorder %s32, 0
      %p162 = por %p160, %p161
      %p163 = scmp.ne.s32.totalorder %s155, %s157
      %p164 = scmp.eq.s32.totalorder %s37, 1
      %p165 = por %p163, %p164
      %p166 = scmp.ne.s32.totalorder %s157, %s158
      %p167 = scmp.eq.s32.totalorder %s37, 0
      %p168 = por %p166, %p167
      %p169 = scmp.ne.s32.totalorder %s157, %s158
      %p170 = scmp.eq.s32.totalorder %s38, 1
      %p171 = por %p169, %p170
      %p173 = scmp.ne.s32.totalorder %s158, %s172
      %p174 = scmp.eq.s32.totalorder %s38, 0
      %p175 = por %p173, %p174
      %s177 = sadd.s32 %s176, 1
      %p180 = scmp.eq.s32.totalorder %s32, 1
      %p181 = scmp.ne.s32.totalorder %s176, %s178
      %p182 = scmp.eq.s32.totalorder %s32, 0
      %p183 = por %p181, %p182
      %p184 = scmp.ne.s32.totalorder %s176, %s178
      %p185 = scmp.eq.s32.totalorder %s37, 1
      %p186 = por %p184, %p185
      %p187 = scmp.ne.s32.totalorder %s178, %s179
      %p188 = scmp.eq.s32.totalorder %s37, 0
      %p189 = por %p187, %p188
      %p190 = scmp.ne.s32.totalorder %s178, %s179
      %p191 = scmp.eq.s32.totalorder %s38, 1
      %p192 = por %p190, %p191
      %p194 = scmp.ne.s32.totalorder %s179, %s193
      %p195 = scmp.eq.s32.totalorder %s38, 0
      %p196 = por %p194, %p195
      %s198 = sadd.s32 %s197, 1
      %p201 = scmp.eq.s32.totalorder %s32, 1
      %p202 = scmp.ne.s32.totalorder %s197, %s199
      %p203 = scmp.eq.s32.totalorder %s32, 0
      %p204 = por %p202, %p203
      %p205 = scmp.ne.s32.totalorder %s197, %s199
      %p206 = scmp.eq.s32.totalorder %s37, 1
      %p207 = por %p205, %p206
      %p208 = scmp.ne.s32.totalorder %s199, %s200
      %p209 = scmp.eq.s32.totalorder %s37, 0
      %p210 = por %p208, %p209
      %p211 = scmp.ne.s32.totalorder %s199, %s200
      %p212 = scmp.eq.s32.totalorder %s38, 1
      %p213 = por %p211, %p212
      %p215 = scmp.ne.s32.totalorder %s200, %s214
      %p216 = scmp.eq.s32.totalorder %s38, 0
      %p217 = por %p215, %p216
      %s219 = sadd.s32 %s218, 1
      %p222 = scmp.eq.s32.totalorder %s32, 1
      %p223 = scmp.ne.s32.totalorder %s218, %s220
      %p224 = scmp.eq.s32.totalorder %s32, 0
      %p225 = por %p223, %p224
      %p226 = scmp.ne.s32.totalorder %s218, %s220
      %p227 = scmp.eq.s32.totalorder %s37, 1
      %p228 = por %p226, %p227
      %p229 = scmp.ne.s32.totalorder %s220, %s221
      %p230 = scmp.eq.s32.totalorder %s37, 0
      %p231 = por %p229, %p230
      %p232 = scmp.ne.s32.totalorder %s220, %s221
      %p233 = scmp.eq.s32.totalorder %s38, 1
      %p234 = por %p232, %p233
      %p236 = scmp.ne.s32.totalorder %s221, %s235
      %p237 = scmp.eq.s32.totalorder %s38, 0
      %p238 = por %p236, %p237
      %s240 = sadd.s32 %s239, 1
      %p243 = scmp.eq.s32.totalorder %s32, 1
      %p244 = scmp.ne.s32.totalorder %s239, %s241
      %p245 = scmp.eq.s32.totalorder %s32, 0
      %p246 = por %p244, %p245
      %p247 = scmp.ne.s32.totalorder %s239, %s241
      %p248 = scmp.eq.s32.totalorder %s37, 1
      %p249 = por %p247, %p248
      %p250 = scmp.ne.s32.totalorder %s241, %s242
      %p251 = scmp.eq.s32.totalorder %s37, 0
      %p252 = por %p250, %p251
      %p253 = scmp.ne.s32.totalorder %s241, %s242
      %p254 = scmp.eq.s32.totalorder %s38, 1
      %p255 = por %p253, %p254
      %p257 = scmp.ne.s32.totalorder %s242, %s256
      %p258 = scmp.eq.s32.totalorder %s38, 0
      %p259 = por %p257, %p258
      %s261 = sadd.s32 %s260, 1
      %p264 = scmp.eq.s32.totalorder %s32, 1
      %p265 = scmp.ne.s32.totalorder %s260, %s262
      %p266 = scmp.eq.s32.totalorder %s32, 0
      %p267 = por %p265, %p266
      %p268 = scmp.ne.s32.totalorder %s260, %s262
      %p269 = scmp.eq.s32.totalorder %s37, 1
      %p270 = por %p268, %p269
      %p271 = scmp.ne.s32.totalorder %s262, %s263
      %p272 = scmp.eq.s32.totalorder %s37, 0
      %p273 = por %p271, %p272
      %p274 = scmp.ne.s32.totalorder %s262, %s263
      %p275 = scmp.eq.s32.totalorder %s38, 1
      %p276 = por %p274, %p275
      %p278 = scmp.ne.s32.totalorder %s263, %s277
      %p279 = scmp.eq.s32.totalorder %s38, 0
      %p280 = por %p278, %p279
      %s282 = sadd.s32 %s281, 1
      %p285 = scmp.eq.s32.totalorder %s32, 1
      %p286 = scmp.ne.s32.totalorder %s281, %s283
      %p287 = scmp.eq.s32.totalorder %s32, 0
      %p288 = por %p286, %p287
      %p289 = scmp.ne.s32.totalorder %s281, %s283
      %p290 = scmp.eq.s32.totalorder %s37, 1
      %p291 = por %p289, %p290
      %p292 = scmp.ne.s32.totalorder %s283, %s284
      %p293 = scmp.eq.s32.totalorder %s37, 0
      %p294 = por %p292, %p293
      %p295 = scmp.ne.s32.totalorder %s283, %s284
      %p296 = scmp.eq.s32.totalorder %s38, 1
      %p297 = por %p295, %p296
      %p299 = scmp.ne.s32.totalorder %s284, %s298
      %p300 = scmp.eq.s32.totalorder %s38, 0
      %p301 = por %p299, %p300
      %s303 = sadd.s32 %s302, 1
      %p306 = scmp.eq.s32.totalorder %s32, 1
      %p307 = scmp.ne.s32.totalorder %s302, %s304
      %p308 = scmp.eq.s32.totalorder %s32, 0
      %p309 = por %p307, %p308
      %p310 = scmp.ne.s32.totalorder %s302, %s304
      %p311 = scmp.eq.s32.totalorder %s37, 1
      %p312 = por %p310, %p311
      %p313 = scmp.ne.s32.totalorder %s304, %s305
      %p314 = scmp.eq.s32.totalorder %s37, 0
      %p315 = por %p313, %p314
      %p316 = scmp.ne.s32.totalorder %s304, %s305
      %p317 = scmp.eq.s32.totalorder %s38, 1
      %p318 = por %p316, %p317
      %p320 = scmp.ne.s32.totalorder %s305, %s319
      %p321 = scmp.eq.s32.totalorder %s38, 0
      %p322 = por %p320, %p321
      %s324 = sadd.s32 %s323, 1
      %p327 = scmp.eq.s32.totalorder %s32, 1
      %p328 = scmp.ne.s32.totalorder %s323, %s325
      %p329 = scmp.eq.s32.totalorder %s32, 0
      %p330 = por %p328, %p329
      %p331 = scmp.ne.s32.totalorder %s323, %s325
      %p332 = scmp.eq.s32.totalorder %s37, 1
      %p333 = por %p331, %p332
      %p334 = scmp.ne.s32.totalorder %s325, %s326
      %p335 = scmp.eq.s32.totalorder %s37, 0
      %p336 = por %p334, %p335
      %p337 = scmp.ne.s32.totalorder %s325, %s326
      %p338 = scmp.eq.s32.totalorder %s38, 1
      %p339 = por %p337, %p338
      %p341 = scmp.ne.s32.totalorder %s326, %s340
      %p342 = scmp.eq.s32.totalorder %s38, 0
      %p343 = por %p341, %p342
      %s345 = sadd.s32 %s344, 1
      %p348 = scmp.eq.s32.totalorder %s32, 1
      %p349 = scmp.ne.s32.totalorder %s344, %s346
      %p350 = scmp.eq.s32.totalorder %s32, 0
      %p351 = por %p349, %p350
      %p352 = scmp.ne.s32.totalorder %s344, %s346
      %p353 = scmp.eq.s32.totalorder %s37, 1
      %p354 = por %p352, %p353
      %p355 = scmp.ne.s32.totalorder %s346, %s347
      %p356 = scmp.eq.s32.totalorder %s37, 0
      %p357 = por %p355, %p356
      %p358 = scmp.ne.s32.totalorder %s346, %s347
      %p359 = scmp.eq.s32.totalorder %s38, 1
      %p360 = por %p358, %p359
      %p362 = scmp.ne.s32.totalorder %s347, %s361
      %p363 = scmp.eq.s32.totalorder %s38, 0
      %p364 = por %p362, %p363
      %s366 = sadd.s32 %s365, 1
      %p369 = scmp.eq.s32.totalorder %s32, 1
      %p370 = scmp.ne.s32.totalorder %s365, %s367
      %p371 = scmp.eq.s32.totalorder %s32, 0
      %p372 = por %p370, %p371
      %p373 = scmp.ne.s32.totalorder %s365, %s367
      %p374 = scmp.eq.s32.totalorder %s37, 1
      %p375 = por %p373, %p374
      %p376 = scmp.ne.s32.totalorder %s367, %s368
      %p377 = scmp.eq.s32.totalorder %s37, 0
      %p378 = por %p376, %p377
      %p379 = scmp.ne.s32.totalorder %s367, %s368
      %p380 = scmp.eq.s32.totalorder %s38, 1
      %p381 = por %p379, %p380
      %p383 = scmp.ne.s32.totalorder %s368, %s382
      %p384 = scmp.eq.s32.totalorder %s38, 0
      %p385 = por %p383, %p384
      %s387 = sadd.s32 %s386, 1
      %p390 = scmp.eq.s32.totalorder %s32, 1
      %p391 = scmp.ne.s32.totalorder %s386, %s388
      %p392 = scmp.eq.s32.totalorder %s32, 0
      %p393 = por %p391, %p392
      %p394 = scmp.ne.s32.totalorder %s386, %s388
      %p395 = scmp.eq.s32.totalorder %s37, 1
      %p396 = por %p394, %p395
      %p397 = scmp.ne.s32.totalorder %s388, %s389
      %p398 = scmp.eq.s32.totalorder %s37, 0
      %p399 = por %p397, %p398
      %p400 = scmp.ne.s32.totalorder %s388, %s389
      %p401 = scmp.eq.s32.totalorder %s38, 1
      %p402 = por %p400, %p401
      %p404 = scmp.ne.s32.totalorder %s389, %s403
      %p405 = scmp.eq.s32.totalorder %s38, 0
      %p406 = por %p404, %p405
      %s408 = sadd.s32 %s407, 1
      %p411 = scmp.eq.s32.totalorder %s32, 1
      %p412 = scmp.ne.s32.totalorder %s407, %s409
      %p413 = scmp.eq.s32.totalorder %s32, 0
      %p414 = por %p412, %p413
      %p415 = scmp.ne.s32.totalorder %s407, %s409
      %p416 = scmp.eq.s32.totalorder %s37, 1
      %p417 = por %p415, %p416
      %p418 = scmp.ne.s32.totalorder %s409, %s410
      %p419 = scmp.eq.s32.totalorder %s37, 0
      %p420 = por %p418, %p419
      %p421 = scmp.ne.s32.totalorder %s409, %s410
      %p422 = scmp.eq.s32.totalorder %s38, 1
      %p423 = por %p421, %p422
      %p425 = scmp.ne.s32.totalorder %s410, %s424
      %p426 = scmp.eq.s32.totalorder %s38, 0
      %p427 = por %p425, %p426
      %s429 = sadd.s32 %s428, 1
      %p432 = scmp.eq.s32.totalorder %s32, 1
      %p433 = scmp.ne.s32.totalorder %s428, %s430
      %p434 = scmp.eq.s32.totalorder %s32, 0
      %p435 = por %p433, %p434
      %p436 = scmp.ne.s32.totalorder %s428, %s430
      %p437 = scmp.eq.s32.totalorder %s37, 1
      %p438 = por %p436, %p437
      %p439 = scmp.ne.s32.totalorder %s430, %s431
      %p440 = scmp.eq.s32.totalorder %s37, 0
      %p441 = por %p439, %p440
      %p442 = scmp.ne.s32.totalorder %s430, %s431
      %p443 = scmp.eq.s32.totalorder %s38, 1
      %p444 = por %p442, %p443
      %p446 = scmp.ne.s32.totalorder %s431, %s445
      %p447 = scmp.eq.s32.totalorder %s38, 0
      %p448 = por %p446, %p447
      %s450 = sadd.s32 %s449, 1
      %p453 = scmp.eq.s32.totalorder %s32, 1
      %p454 = scmp.ne.s32.totalorder %s449, %s451
      %p455 = scmp.eq.s32.totalorder %s32, 0
      %p456 = por %p454, %p455
      %p457 = scmp.ne.s32.totalorder %s449, %s451
      %p458 = scmp.eq.s32.totalorder %s37, 1
      %p459 = por %p457, %p458
      %p460 = scmp.ne.s32.totalorder %s451, %s452
      %p461 = scmp.eq.s32.totalorder %s37, 0
      %p462 = por %p460, %p461
      %p463 = scmp.ne.s32.totalorder %s451, %s452
      %p464 = scmp.eq.s32.totalorder %s38, 1
      %p465 = por %p463, %p464
      %p467 = scmp.ne.s32.totalorder %s452, %s466
      %p468 = scmp.eq.s32.totalorder %s38, 0
      %p469 = por %p467, %p468
      %s471 = sadd.s32 %s470, 1
      %p474 = scmp.eq.s32.totalorder %s32, 1
      %p475 = scmp.ne.s32.totalorder %s470, %s472
      %p476 = scmp.eq.s32.totalorder %s32, 0
      %p477 = por %p475, %p476
      %p478 = scmp.ne.s32.totalorder %s470, %s472
      %p479 = scmp.eq.s32.totalorder %s37, 1
      %p480 = por %p478, %p479
      %p481 = scmp.ne.s32.totalorder %s472, %s473
      %p482 = scmp.eq.s32.totalorder %s37, 0
      %p483 = por %p481, %p482
      %p484 = scmp.ne.s32.totalorder %s472, %s473
      %p485 = scmp.eq.s32.totalorder %s38, 1
      %p486 = por %p484, %p485
      %p488 = scmp.ne.s32.totalorder %s473, %s487
      %p489 = scmp.eq.s32.totalorder %s38, 0
      %p490 = por %p488, %p489
      %s492 = sadd.s32 %s491, 1
      %p495 = scmp.eq.s32.totalorder %s32, 1
      %p496 = scmp.ne.s32.totalorder %s491, %s493
      %p497 = scmp.eq.s32.totalorder %s32, 0
      %p498 = por %p496, %p497
      %p499 = scmp.ne.s32.totalorder %s491, %s493
      %p500 = scmp.eq.s32.totalorder %s37, 1
      %p501 = por %p499, %p500
      %p502 = scmp.ne.s32.totalorder %s493, %s494
      %p503 = scmp.eq.s32.totalorder %s37, 0
      %p504 = por %p502, %p503
      %p505 = scmp.ne.s32.totalorder %s493, %s494
      %p506 = scmp.eq.s32.totalorder %s38, 1
      %p507 = por %p505, %p506
      %p509 = scmp.ne.s32.totalorder %s494, %s508
      %p510 = scmp.eq.s32.totalorder %s38, 0
      %p511 = por %p509, %p510
      %s512 = ssub.s32 %s32, %s39
      %p513 = scmp.eq.s32.totalorder %s512, 0
      %s515 = sadd.s32 %s514, 1
      %s516 = scalar_select %p513, %s514, %s515
      %p519 = pneg %p513
      %p520 = scmp.eq.s32.totalorder %s32, 1
      %p521 = por %p519, %p520
      %p522 = scmp.ne.s32.totalorder %s514, %s517
      %p523 = scmp.eq.s32.totalorder %s32, 0
      %p524 = por %p522, %p523
      %p525 = scmp.ne.s32.totalorder %s514, %s517
      %p526 = scmp.eq.s32.totalorder %s37, 1
      %p527 = por %p525, %p526
      %p528 = scmp.ne.s32.totalorder %s517, %s518
      %p529 = scmp.eq.s32.totalorder %s37, 0
      %p530 = por %p528, %p529
      %p531 = scmp.ne.s32.totalorder %s517, %s518
      %p532 = scmp.eq.s32.totalorder %s38, 1
      %p533 = por %p531, %p532
      %p535 = scmp.ne.s32.totalorder %s518, %s534
      %p536 = scmp.eq.s32.totalorder %s38, 0
      %p537 = por %p535, %p536
      %p538 = scmp.le.s32.totalorder 1, %s32
      %p539 = scmp.lt.s32.totalorder %s32, 3
      %p540 = pnand %p538, %p539
      %p541 = pneg %p540
      // Predicated region
      $region9: #{lorentz_encoder_layer.1} parent=5 // pred_check
        _
      $region10: #{lorentz_encoder_layer.1} parent=5 // pred_check_branch
        %543 = sbr.rel (%p540) target = $region12
      $region11: #{lorentz_encoder_layer.1} parent=5 // pred_region
        %s544 = ssub.s32 %s32, 1
        // Predicated region
        $region13: #{lorentz_encoder_layer.1} parent=11 // pred_check
          %p545 = pneg %p53
        $region14: #{lorentz_encoder_layer.1} parent=11 // pred_check_branch
          %547 = sbr.rel (%p545) target = $region16
        $region15: #{lorentz_encoder_layer.1} parent=11 // pred_region
          %s549 = ssub.s32 16, 16
          %550 = vsyncadd [#allocation4], %s549
          %s552 = sshll.u32 %s0, 4
          %s553 = int_to_ptr.vmem [resolvable:$true] %s552
          %555 = dma.vmem_to_smem %s553, 16, [#allocation2], [#allocation4]
        $region16: #{lorentz_encoder_layer.1} parent=11 // pred_fallthru
          _
        // Predicated region
        $region17: #{lorentz_encoder_layer.1} parent=11 // pred_check
          %p556 = pneg %p126
        $region18: #{lorentz_encoder_layer.1} parent=11 // pred_check_branch
          %558 = sbr.rel (%p556) target = $region20
        $region19: #{lorentz_encoder_layer.1} parent=11 // pred_region
          _
        $region20: #{lorentz_encoder_layer.1} parent=11 // pred_fallthru
          _
        // Predicated region
        $region21: #{lorentz_encoder_layer.1} parent=11 // pred_check
          %p559 = pneg %p147
        $region22: #{lorentz_encoder_layer.1} parent=11 // pred_check_branch
          %561 = sbr.rel (%p559) target = $region24
        $region23: #{lorentz_encoder_layer.1} parent=11 // pred_region
          _
        $region24: #{lorentz_encoder_layer.1} parent=11 // pred_fallthru
          _
        // Predicated region
        $region25: #{lorentz_encoder_layer.1} parent=11 // pred_check
          %p562 = pneg %p168
        $region26: #{lorentz_encoder_layer.1} parent=11 // pred_check_branch
          %564 = sbr.rel (%p562) target = $region28
        $region27: #{lorentz_encoder_layer.1} parent=11 // pred_region
          _
        $region28: #{lorentz_encoder_layer.1} parent=11 // pred_fallthru
          _
        // Predicated region
        $region29: #{lorentz_encoder_layer.1} parent=11 // pred_check
          %p565 = pneg %p189
        $region30: #{lorentz_encoder_layer.1} parent=11 // pred_check_branch
          %567 = sbr.rel (%p565) target = $region32
        $region31: #{lorentz_encoder_layer.1} parent=11 // pred_region
          _
        $region32: #{lorentz_encoder_layer.1} parent=11 // pred_fallthru
          _
        // Predicated region
        $region33: #{lorentz_encoder_layer.1} parent=11 // pred_check
          %p568 = pneg %p210
        $region34: #{lorentz_encoder_layer.1} parent=11 // pred_check_branch
          %570 = sbr.rel (%p568) target = $region36
        $region35: #{lorentz_encoder_layer.1} parent=11 // pred_region
          _
        $region36: #{lorentz_encoder_layer.1} parent=11 // pred_fallthru
          _
        // Predicated region
        $region37: #{lorentz_encoder_layer.1} parent=11 // pred_check
          %p571 = pneg %p231
        $region38: #{lorentz_encoder_layer.1} parent=11 // pred_check_branch
          %573 = sbr.rel (%p571) target = $region40
        $region39: #{lorentz_encoder_layer.1} parent=11 // pred_region
          _
        $region40: #{lorentz_encoder_layer.1} parent=11 // pred_fallthru
          _
        // Predicated region
        $region41: #{lorentz_encoder_layer.1} parent=11 // pred_check
          %p574 = pneg %p252
        $region42: #{lorentz_encoder_layer.1} parent=11 // pred_check_branch
          %576 = sbr.rel (%p574) target = $region44
        $region43: #{lorentz_encoder_layer.1} parent=11 // pred_region
          _
        $region44: #{lorentz_encoder_layer.1} parent=11 // pred_fallthru
          _
        // Predicated region
        $region45: #{lorentz_encoder_layer.1} parent=11 // pred_check
          %p577 = pneg %p273
        $region46: #{lorentz_encoder_layer.1} parent=11 // pred_check_branch
          %579 = sbr.rel (%p577) target = $region48
        $region47: #{lorentz_encoder_layer.1} parent=11 // pred_region
          _
        $region48: #{lorentz_encoder_layer.1} parent=11 // pred_fallthru
          _
        // Predicated region
        $region49: #{lorentz_encoder_layer.1} parent=11 // pred_check
          %p580 = pneg %p294
        $region50: #{lorentz_encoder_layer.1} parent=11 // pred_check_branch
          %582 = sbr.rel (%p580) target = $region52
        $region51: #{lorentz_encoder_layer.1} parent=11 // pred_region
          _
        $region52: #{lorentz_encoder_layer.1} parent=11 // pred_fallthru
          _
        // Predicated region
        $region53: #{lorentz_encoder_layer.1} parent=11 // pred_check
          %p583 = pneg %p315
        $region54: #{lorentz_encoder_layer.1} parent=11 // pred_check_branch
          %585 = sbr.rel (%p583) target = $region56
        $region55: #{lorentz_encoder_layer.1} parent=11 // pred_region
          _
        $region56: #{lorentz_encoder_layer.1} parent=11 // pred_fallthru
          _
        // Predicated region
        $region57: #{lorentz_encoder_layer.1} parent=11 // pred_check
          %p586 = pneg %p336
        $region58: #{lorentz_encoder_layer.1} parent=11 // pred_check_branch
          %588 = sbr.rel (%p586) target = $region60
        $region59: #{lorentz_encoder_layer.1} parent=11 // pred_region
          _
        $region60: #{lorentz_encoder_layer.1} parent=11 // pred_fallthru
          _
        // Predicated region
        $region61: #{lorentz_encoder_layer.1} parent=11 // pred_check
          %p589 = pneg %p357
        $region62: #{lorentz_encoder_layer.1} parent=11 // pred_check_branch
          %591 = sbr.rel (%p589) target = $region64
        $region63: #{lorentz_encoder_layer.1} parent=11 // pred_region
          _
        $region64: #{lorentz_encoder_layer.1} parent=11 // pred_fallthru
          _
        // Predicated region
        $region65: #{lorentz_encoder_layer.1} parent=11 // pred_check
          %p592 = pneg %p378
        $region66: #{lorentz_encoder_layer.1} parent=11 // pred_check_branch
          %594 = sbr.rel (%p592) target = $region68
        $region67: #{lorentz_encoder_layer.1} parent=11 // pred_region
          _
        $region68: #{lorentz_encoder_layer.1} parent=11 // pred_fallthru
          _
        // Predicated region
        $region69: #{lorentz_encoder_layer.1} parent=11 // pred_check
          %p595 = pneg %p399
        $region70: #{lorentz_encoder_layer.1} parent=11 // pred_check_branch
          %597 = sbr.rel (%p595) target = $region72
        $region71: #{lorentz_encoder_layer.1} parent=11 // pred_region
          _
        $region72: #{lorentz_encoder_layer.1} parent=11 // pred_fallthru
          _
        // Predicated region
        $region73: #{lorentz_encoder_layer.1} parent=11 // pred_check
          %p598 = pneg %p420
        $region74: #{lorentz_encoder_layer.1} parent=11 // pred_check_branch
          %600 = sbr.rel (%p598) target = $region76
        $region75: #{lorentz_encoder_layer.1} parent=11 // pred_region
          _
        $region76: #{lorentz_encoder_layer.1} parent=11 // pred_fallthru
          _
        // Predicated region
        $region77: #{lorentz_encoder_layer.1} parent=11 // pred_check
          %p601 = pneg %p441
        $region78: #{lorentz_encoder_layer.1} parent=11 // pred_check_branch
          %603 = sbr.rel (%p601) target = $region80
        $region79: #{lorentz_encoder_layer.1} parent=11 // pred_region
          _
        $region80: #{lorentz_encoder_layer.1} parent=11 // pred_fallthru
          _
        // Predicated region
        $region81: #{lorentz_encoder_layer.1} parent=11 // pred_check
          %p604 = pneg %p462
        $region82: #{lorentz_encoder_layer.1} parent=11 // pred_check_branch
          %606 = sbr.rel (%p604) target = $region84
        $region83: #{lorentz_encoder_layer.1} parent=11 // pred_region
          _
        $region84: #{lorentz_encoder_layer.1} parent=11 // pred_fallthru
          _
        // Predicated region
        $region85: #{lorentz_encoder_layer.1} parent=11 // pred_check
          %p607 = pneg %p483
        $region86: #{lorentz_encoder_layer.1} parent=11 // pred_check_branch
          %609 = sbr.rel (%p607) target = $region88
        $region87: #{lorentz_encoder_layer.1} parent=11 // pred_region
          _
        $region88: #{lorentz_encoder_layer.1} parent=11 // pred_fallthru
          _
        // Predicated region
        $region89: #{lorentz_encoder_layer.1} parent=11 // pred_check
          %p610 = pneg %p504
        $region90: #{lorentz_encoder_layer.1} parent=11 // pred_check_branch
          %612 = sbr.rel (%p610) target = $region92
        $region91: #{lorentz_encoder_layer.1} parent=11 // pred_region
          _
        $region92: #{lorentz_encoder_layer.1} parent=11 // pred_fallthru
          _
      $region12: #{lorentz_encoder_layer.1} parent=5 // pred_fallthru
        _
      %p613 = scmp.lt.s32.totalorder %s32, 2
      // Predicated region
      $region93: #{lorentz_encoder_layer.1} parent=5 // pred_check
        %p614 = pneg %p613
      $region94: #{lorentz_encoder_layer.1} parent=5 // pred_check_branch
        %616 = sbr.rel (%p614) target = $region96
      $region95: #{lorentz_encoder_layer.1} parent=5 // pred_region
        // Predicated region
        $region97: #{lorentz_encoder_layer.1} parent=95 // pred_check
          %p617 = pneg %p73
        $region98: #{lorentz_encoder_layer.1} parent=95 // pred_check_branch
          %619 = sbr.rel (%p617) target = $region100
        $region99: #{lorentz_encoder_layer.1} parent=95 // pred_region
          %p620 = scmp.lt.s32.totalorder %s32, 1
          %s621 = scalar_select %p620, %s32, 1
          %s622 = smul.addr %s621, 8
          %s623 = scalar_lea.vmem %s1, %s622
        $region100: #{lorentz_encoder_layer.1} parent=95 // pred_fallthru
          _
        // Predicated region
        $region101: #{lorentz_encoder_layer.1} parent=95 // pred_check
          %p624 = pneg %p99
        $region102: #{lorentz_encoder_layer.1} parent=95 // pred_check_branch
          %626 = sbr.rel (%p624) target = $region104
        $region103: #{lorentz_encoder_layer.1} parent=95 // pred_region
          %p627 = scmp.lt.s32.totalorder %s32, 1
          %s628 = scalar_select %p627, %s32, 1
          %s629 = scalar_lea.vmem %s2, %s628
        $region104: #{lorentz_encoder_layer.1} parent=95 // pred_fallthru
          _
      $region96: #{lorentz_encoder_layer.1} parent=5 // pred_fallthru
        _
      %p630 = scmp.le.s32.totalorder 1, %s32
      %p631 = scmp.lt.s32.totalorder %s32, 3
      %p632 = pnand %p630, %p631
      %p633 = pneg %p632
      // Predicated region
      $region105: #{lorentz_encoder_layer.1} parent=5 // pred_check
        _
      $region106: #{lorentz_encoder_layer.1} parent=5 // pred_check_branch
        %635 = sbr.rel (%p632) target = $region108
      $region107: #{lorentz_encoder_layer.1} parent=5 // pred_region
        %s636 = ssub.s32 %s32, 1
        // Predicated region
        $region109: #{lorentz_encoder_layer.1} parent=107 // pred_check
          %p637 = pneg %p53
        $region110: #{lorentz_encoder_layer.1} parent=107 // pred_check_branch
          %639 = sbr.rel (%p637) target = $region112
        $region111: #{lorentz_encoder_layer.1} parent=107 // pred_region
          %640 = dma.done [#allocation4], 16
        $region112: #{lorentz_encoder_layer.1} parent=107 // pred_fallthru
          _
        %641 = sfence
        %p642 = pneg %p53
        %p643 = pneg %p50
        %p644 = scmp.lt.s32.totalorder %s37, 1
        %s645 = scalar_select %p644, %s37, 1
        %s646 = smul.addr %s645, 8
        %s647 = scalar_lea.vmem %s1, %s646
        %p648 = pneg %p79
        %p649 = pneg %p76
        %p650 = scmp.lt.s32.totalorder %s37, 1
        %s651 = scalar_select %p650, %s37, 1
        %s652 = scalar_lea.vmem %s2, %s651
        %p653 = pneg %p105
        %p654 = pneg %p102
        %p655 = pneg %p126
        %p656 = pneg %p123
        %p657 = pneg %p147
        %p658 = pneg %p144
        %p659 = pneg %p168
        %p660 = pneg %p165
        %p661 = pneg %p189
        %p662 = pneg %p186
        %p663 = pneg %p210
        %p664 = pneg %p207
        %p665 = pneg %p231
        %p666 = pneg %p228
        %p667 = pneg %p252
        %p668 = pneg %p249
        %p669 = pneg %p273
        %p670 = pneg %p270
        %p671 = pneg %p294
        %p672 = pneg %p291
        %p673 = pneg %p315
        %p674 = pneg %p312
        %p675 = pneg %p336
        %p676 = pneg %p333
        %p677 = pneg %p357
        %p678 = pneg %p354
        %p679 = pneg %p378
        %p680 = pneg %p375
        %p681 = pneg %p399
        %p682 = pneg %p396
        %p683 = pneg %p420
        %p684 = pneg %p417
        %p685 = pneg %p441
        %p686 = pneg %p438
        %p687 = pneg %p462
        %p688 = pneg %p459
        %p689 = pneg %p483
        %p690 = pneg %p480
        %p691 = pneg %p504
        %p692 = pneg %p501
        %p693 = pneg %p530
        %p694 = pneg %p527
        %s695 = sand.u32 %s517, 1
        %s696 = scalar_lea.sflag [#allocation3], %s695
        %s697 = sand.u32 %s517, 1
        %s698 = smul.addr %s697, 8
        %s699 = scalar_lea.vmem [#allocation5], %s698
        %p700 = scmp.lt.s32.totalorder %s37, 1
        %s701 = scalar_select %p700, %s37, 1
        %s702 = smul.addr %s701, 8
        %s703 = scalar_lea.vmem %s1, %s702
        %p704 = scmp.lt.s32.totalorder %s37, 1
        %s705 = scalar_select %p704, %s37, 1
        %s706 = scalar_lea.vmem %s2, %s705
        %v707 = vld [vmem:[%s703] sm:$0xff]
        %s708 = sld [smem:[#allocation2]]
        %s709 = sld [smem:[#allocation2 + $0x1]]
        %s710 = sld [smem:[#allocation2 + $0x2]]
        %s711 = sld [smem:[#allocation2 + $0x3]]
        %s712 = sld [smem:[#allocation2 + $0x4]]
        %v713 = vld [vmem:[%s3] sm:$0xff]
        %v714 = vld [vmem:[%s3 + $0x8] sm:$0xff]
        %v715 = vld [vmem:[%s3 + $0x10] sm:$0xff]
        %v716 = vld [vmem:[%s3 + $0x18] sm:$0xff]
        %v717 = vld [vmem:[%s4] sm:$0x1]
        %v719 = vlaneseq
        %v720 = vshrl.u32 %v719, 7
        %v721 = vsub.s32 0, %v720
        %v722 = vrot.slane %v717, %v721
        %vm724 = vcmask 261120
        %v726 = vsel %vm724, %v707, 0
        %728 = vmatprep.subr.mxu0 0.0
        %729 = vmatpush1.msra.mxu0 0.0
        %730 = vmatprep.subr.mxu0 0.0
        %731 = vmatpush1.msra.mxu0 0.0
        %732 = vmatprep.subr.mxu0 0.0
        %733 = vmatpush1.msra.mxu0 0.0
        %734 = vmatprep.subr.mxu0 0.0
        %735 = vmatpush1.msra.mxu0 0.0
        %736 = vmatprep.subr.mxu0 0.0
        %737 = vmatpush1.msra.mxu0 0.0
        %738 = vmatprep.subr.mxu0 0.0
        %739 = vmatpush1.msra.mxu0 0.0
        %740 = vmatprep.subr.mxu0 0.0
        %741 = vmatpush1.msra.mxu0 0.0
        %742 = vmatprep.subr.mxu0 0.0
        %743 = vmatpush1.msra.mxu0 0.0
        %744 = vmatprep.subr.mxu0 0.0
        %745 = vmatpush1.msra.mxu0 0.0
        %746 = vmatprep.subr.mxu0 0.0
        %747 = vmatpush1.msra.mxu0 0.0
        %748 = vmatprep.subr.mxu0 0.0
        %749 = vmatpush1.msra.mxu0 0.0
        %750 = vmatprep.subr.mxu0 0.0
        %751 = vmatpush1.msra.mxu0 0.0
        %752 = vmatprep.subr.mxu0 0.0
        %753 = vmatpush1.msra.mxu0 %v716
        %754 = vmatprep.subr.mxu0 0.0
        %755 = vmatpush1.msra.mxu0 %v715
        %756 = vmatprep.subr.mxu0 0.0
        %757 = vmatpush1.msra.mxu0 %v714
        %758 = vmatprep.subr.mxu0 0.0
        %759 = vmatpush1.msra.mxu0 %v713
        %760 = vmatprep.subr.mxu0 0.0
        %761 = vmatpush2.msra.mxu0 0.0
        %762 = vmatprep.subr.mxu0 0.0
        %763 = vmatpush2.msra.mxu0 0.0
        %764 = vmatprep.subr.mxu0 0.0
        %765 = vmatpush2.msra.mxu0 0.0
        %766 = vmatprep.subr.mxu0 0.0
        %767 = vmatpush2.msra.mxu0 0.0
        %768 = vmatprep.subr.mxu0 0.0
        %769 = vmatpush2.msra.mxu0 0.0
        %770 = vmatprep.subr.mxu0 0.0
        %771 = vmatpush2.msra.mxu0 0.0
        %772 = vmatprep.subr.mxu0 0.0
        %773 = vmatpush2.msra.mxu0 0.0
        %774 = vmatprep.subr.mxu0 0.0
        %775 = vmatpush2.msra.mxu0 0.0
        %776 = vmatprep.subr.mxu0 0.0
        %777 = vmatpush2.msra.mxu0 0.0
        %778 = vmatprep.subr.mxu0 0.0
        %779 = vmatpush2.msra.mxu0 0.0
        %780 = vmatprep.subr.mxu0 0.0
        %781 = vmatpush2.msra.mxu0 0.0
        %782 = vmatprep.subr.mxu0 0.0
        %783 = vmatpush2.msra.mxu0 0.0
        %784 = vmatprep.subr.mxu0 0.0
        %785 = vmatpush2.msra.mxu0 0.0
        %786 = vmatprep.subr.mxu0 0.0
        %787 = vmatpush2.msra.mxu0 0.0
        %788 = vmatprep.subr.mxu0 0.0
        %789 = vmatpush2.msra.mxu0 0.0
        %790 = vmatprep.subr.mxu0 0.0
        %791 = vmatpush2.msra.mxu0 0.0
        %792 = vmatprep.mubr.f32.mxu0 0.0
        %793 = vmatmul.mubr.f32.gmra.mxu0 %v726
        %v794 = vpop.f32.mrf.mxu0
        %v795 = vadd.f32 %v722, %v794
        %v796 = vpop.f32.mrf.mxu0
        %797 = vdwg.mxu0
        %v798 = vld [vmem:[%s10] sm:$0x1]
        %v799 = vld [vmem:[%s13] sm:$0xff]
        %v800 = vld [vmem:[%s13 + $0x8] sm:$0xff]
        %v801 = vld [vmem:[%s13 + $0x10] sm:$0xff]
        %v802 = vld [vmem:[%s13 + $0x18] sm:$0xff]
        %v803 = vld [vmem:[%s13 + $0x20] sm:$0xff]
        %v804 = vld [vmem:[%s13 + $0x28] sm:$0xff]
        %v805 = vld [vmem:[%s13 + $0x30] sm:$0xff]
        %v806 = vld [vmem:[%s13 + $0x38] sm:$0xff]
        %v807 = vld [vmem:[%s13 + $0x40] sm:$0xff]
        %v808 = vld [vmem:[%s13 + $0x48] sm:$0xff]
        %v809 = vld [vmem:[%s13 + $0x50] sm:$0xff]
        %v810 = vld [vmem:[%s13 + $0x58] sm:$0xff]
        %v811 = vld [vmem:[%s11] sm:$0x1]
        %v813 = vlaneseq
        %v814 = vshrl.u32 %v813, 7
        %v815 = vsub.s32 0, %v814
        %v816 = vrot.slane %v798, %v815
        %v818 = vmul.f32 %v795, %v816
        %vm819 = vcmask 785408
        %v821 = vsel %vm819, %v818, 0
        %823 = vmatprep.subr.mxu0 0.0
        %824 = vmatpush1.msra.mxu0 0.0
        %825 = vmatprep.subr.mxu0 0.0
        %826 = vmatpush1.msra.mxu0 0.0
        %827 = vmatprep.subr.mxu0 0.0
        %828 = vmatpush1.msra.mxu0 0.0
        %829 = vmatprep.subr.mxu0 0.0
        %830 = vmatpush1.msra.mxu0 0.0
        %831 = vmatprep.subr.mxu0 0.0
        %832 = vmatpush1.msra.mxu0 %v810
        %833 = vmatprep.subr.mxu0 0.0
        %834 = vmatpush1.msra.mxu0 %v809
        %835 = vmatprep.subr.mxu0 0.0
        %836 = vmatpush1.msra.mxu0 %v808
        %837 = vmatprep.subr.mxu0 0.0
        %838 = vmatpush1.msra.mxu0 %v807
        %839 = vmatprep.subr.mxu0 0.0
        %840 = vmatpush1.msra.mxu0 %v806
        %841 = vmatprep.subr.mxu0 0.0
        %842 = vmatpush1.msra.mxu0 %v805
        %843 = vmatprep.subr.mxu0 0.0
        %844 = vmatpush1.msra.mxu0 %v804
        %845 = vmatprep.subr.mxu0 0.0
        %846 = vmatpush1.msra.mxu0 %v803
        %847 = vmatprep.subr.mxu0 0.0
        %848 = vmatpush1.msra.mxu0 %v802
        %849 = vmatprep.subr.mxu0 0.0
        %850 = vmatpush1.msra.mxu0 %v801
        %851 = vmatprep.subr.mxu0 0.0
        %852 = vmatpush1.msra.mxu0 %v800
        %853 = vmatprep.subr.mxu0 0.0
        %854 = vmatpush1.msra.mxu0 %v799
        %855 = vmatprep.subr.mxu0 0.0
        %856 = vmatpush2.msra.mxu0 0.0
        %857 = vmatprep.subr.mxu0 0.0
        %858 = vmatpush2.msra.mxu0 0.0
        %859 = vmatprep.subr.mxu0 0.0
        %860 = vmatpush2.msra.mxu0 0.0
        %861 = vmatprep.subr.mxu0 0.0
        %862 = vmatpush2.msra.mxu0 0.0
        %863 = vmatprep.subr.mxu0 0.0
        %864 = vmatpush2.msra.mxu0 0.0
        %865 = vmatprep.subr.mxu0 0.0
        %866 = vmatpush2.msra.mxu0 0.0
        %867 = vmatprep.subr.mxu0 0.0
        %868 = vmatpush2.msra.mxu0 0.0
        %869 = vmatprep.subr.mxu0 0.0
        %870 = vmatpush2.msra.mxu0 0.0
        %871 = vmatprep.subr.mxu0 0.0
        %872 = vmatpush2.msra.mxu0 0.0
        %873 = vmatprep.subr.mxu0 0.0
        %874 = vmatpush2.msra.mxu0 0.0
        %875 = vmatprep.subr.mxu0 0.0
        %876 = vmatpush2.msra.mxu0 0.0
        %877 = vmatprep.subr.mxu0 0.0
        %878 = vmatpush2.msra.mxu0 0.0
        %879 = vmatprep.subr.mxu0 0.0
        %880 = vmatpush2.msra.mxu0 0.0
        %881 = vmatprep.subr.mxu0 0.0
        %882 = vmatpush2.msra.mxu0 0.0
        %883 = vmatprep.subr.mxu0 0.0
        %884 = vmatpush2.msra.mxu0 0.0
        %885 = vmatprep.subr.mxu0 0.0
        %886 = vmatpush2.msra.mxu0 0.0
        %887 = vmatprep.mubr.f32.mxu0 0.0
        %888 = vmatmul.mubr.f32.gmra.mxu0 %v821
        %v889 = vpop.f32.mrf.mxu0
        %v890 = vadd.f32 0.0, %v889
        %v891 = vpop.f32.mrf.mxu0
        %892 = vdwg.mxu0
        %v893 = vmul.f32 %v795, %v795
        %v895 = vsel %vm819, %v893, 0
        %897 = vmatprep.subr.mxu0 0.0
        %898 = vmatpush1.msra.mxu0 0.0
        %899 = vmatprep.subr.mxu0 0.0
        %900 = vmatpush1.msra.mxu0 0.0
        %901 = vmatprep.subr.mxu0 0.0
        %902 = vmatpush1.msra.mxu0 0.0
        %903 = vmatprep.subr.mxu0 0.0
        %904 = vmatpush1.msra.mxu0 0.0
        %905 = vmatprep.subr.mxu0 0.0
        %906 = vmatpush1.msra.mxu0 %v810
        %907 = vmatprep.subr.mxu0 0.0
        %908 = vmatpush1.msra.mxu0 %v809
        %909 = vmatprep.subr.mxu0 0.0
        %910 = vmatpush1.msra.mxu0 %v808
        %911 = vmatprep.subr.mxu0 0.0
        %912 = vmatpush1.msra.mxu0 %v807
        %913 = vmatprep.subr.mxu0 0.0
        %914 = vmatpush1.msra.mxu0 %v806
        %915 = vmatprep.subr.mxu0 0.0
        %916 = vmatpush1.msra.mxu0 %v805
        %917 = vmatprep.subr.mxu0 0.0
        %918 = vmatpush1.msra.mxu0 %v804
        %919 = vmatprep.subr.mxu0 0.0
        %920 = vmatpush1.msra.mxu0 %v803
        %921 = vmatprep.subr.mxu0 0.0
        %922 = vmatpush1.msra.mxu0 %v802
        %923 = vmatprep.subr.mxu0 0.0
        %924 = vmatpush1.msra.mxu0 %v801
        %925 = vmatprep.subr.mxu0 0.0
        %926 = vmatpush1.msra.mxu0 %v800
        %927 = vmatprep.subr.mxu0 0.0
        %928 = vmatpush1.msra.mxu0 %v799
        %929 = vmatprep.subr.mxu0 0.0
        %930 = vmatpush2.msra.mxu0 0.0
        %931 = vmatprep.subr.mxu0 0.0
        %932 = vmatpush2.msra.mxu0 0.0
        %933 = vmatprep.subr.mxu0 0.0
        %934 = vmatpush2.msra.mxu0 0.0
        %935 = vmatprep.subr.mxu0 0.0
        %936 = vmatpush2.msra.mxu0 0.0
        %937 = vmatprep.subr.mxu0 0.0
        %938 = vmatpush2.msra.mxu0 0.0
        %939 = vmatprep.subr.mxu0 0.0
        %940 = vmatpush2.msra.mxu0 0.0
        %941 = vmatprep.subr.mxu0 0.0
        %942 = vmatpush2.msra.mxu0 0.0
        %943 = vmatprep.subr.mxu0 0.0
        %944 = vmatpush2.msra.mxu0 0.0
        %945 = vmatprep.subr.mxu0 0.0
        %946 = vmatpush2.msra.mxu0 0.0
        %947 = vmatprep.subr.mxu0 0.0
        %948 = vmatpush2.msra.mxu0 0.0
        %949 = vmatprep.subr.mxu0 0.0
        %950 = vmatpush2.msra.mxu0 0.0
        %951 = vmatprep.subr.mxu0 0.0
        %952 = vmatpush2.msra.mxu0 0.0
        %953 = vmatprep.subr.mxu0 0.0
        %954 = vmatpush2.msra.mxu0 0.0
        %955 = vmatprep.subr.mxu0 0.0
        %956 = vmatpush2.msra.mxu0 0.0
        %957 = vmatprep.subr.mxu0 0.0
        %958 = vmatpush2.msra.mxu0 0.0
        %959 = vmatprep.subr.mxu0 0.0
        %960 = vmatpush2.msra.mxu0 0.0
        %961 = vmatprep.mubr.f32.mxu0 0.0
        %962 = vmatmul.mubr.f32.gmra.mxu0 %v895
        %v963 = vpop.f32.mrf.mxu0
        %v964 = vadd.f32 0.0, %v963
        %v965 = vpop.f32.mrf.mxu0
        %966 = vdwg.mxu0
        %v967 = vmul.f32 %v890, %v890
        %v968 = vsub.f32 %v964, %v967
        %v969 = vmax.f32 %v968, 1e-08
        %v970 = vxor.u32 %v890, 2147483648
        %v971 = vmul.f32 %v970, 1.442695
        %v972 = vpow.pop %v971
        %v973 = vadd.f32 %v972, 1.0
        %v974 = vrcp.pop %v973
        %v975 = vmul.f32 1.0, %v974
        %v977 = vlaneseq
        %v978 = vshrl.u32 %v977, 7
        %v979 = vsub.s32 0, %v978
        %v980 = vrot.slane %v811, %v979
        %v982 = vmul.f32 %v975, %v980
        %v983 = vadd.f32 %v982, 1.1
        %v984 = vmul.f32 %v983, %v983
        %v985 = vsub.f32 %v984, 1.0
        %v986 = vrsqrt.pop %v985
        %v987 = vmul.f32 %v985, %v986
        %vm988 = vcmp.eq.f32.partialorder %v985, inf
        %v989 = vsel %vm988, %v985, %v987
        %vm990 = vcmp.eq.f32.partialorder %v985, 0.0
        %v991 = vand.u32 %v985, 2147483648
        %v992 = vsel %vm990, %v991, %v989
        %v993 = vrsqrt.pop %v969
        %v994 = vmul.f32 %v992, %v993
        %vm995 = vcmp.gt.f32.partialorder %v798, 0.5
        %v996 = vmul.f32 %v795, %v994
        %v997 = vsel %vm995, 1, 0
        %v998 = vlaneseq
        %v999 = vshrl.u32 %v998, 7
        %v1000 = vsub.s32 0, %v999
        %v1001 = vrot.slane %v997, %v1000
        %vm1002 = vcmp.eq.s32.totalorder %v1001, 1
        %v1003 = vsel %vm1002, %v983, %v996
        %v1004 = vld [vmem:[%s12] sm:$0x1]
        %v1006 = vlaneseq
        %v1007 = vshrl.u32 %v1006, 7
        %v1008 = vsub.s32 0, %v1007
        %v1009 = vrot.slane %v1004, %v1008
        %v1011 = vmul.f32 %v1003, %v1009
        %v1012 = vld [vmem:[%s14] sm:$0xff]
        %v1013 = vld [vmem:[%s14 + $0x8] sm:$0xff]
        %v1014 = vld [vmem:[%s14 + $0x10] sm:$0xff]
        %v1015 = vld [vmem:[%s14 + $0x18] sm:$0xff]
        %1020 = vrot.lane.b32.xlu0 %v1012, 32
        %v1021 = vpop.permute.xlu0 %1020
        %1022 = vrot.lane.b32.xlu0 %v1013, 32
        %v1023 = vpop.permute.xlu0 %1022
        %1024 = vrot.lane.b32.xlu0 %v1014, 32
        %v1025 = vpop.permute.xlu0 %1024
        %1026 = vrot.lane.b32.xlu0 %v1015, 32
        %v1027 = vpop.permute.xlu0 %1026
        %v1032 = vmul.f32 %v1011, %v1021
        %v1033 = vmul.f32 %v1011, %v1023
        %v1034 = vmul.f32 %v1011, %v1025
        %v1035 = vmul.f32 %v1011, %v1027
        %1036 = vrot.lane.b32.xlu0 %v1012, 64
        %v1037 = vpop.permute.xlu0 %1036
        %1038 = vrot.lane.b32.xlu0 %v1013, 64
        %v1039 = vpop.permute.xlu0 %1038
        %1040 = vrot.lane.b32.xlu0 %v1014, 64
        %v1041 = vpop.permute.xlu0 %1040
        %1042 = vrot.lane.b32.xlu0 %v1015, 64
        %v1043 = vpop.permute.xlu0 %1042
        %v1048 = vmul.f32 %v1011, %v1037
        %v1049 = vmul.f32 %v1011, %v1039
        %v1050 = vmul.f32 %v1011, %v1041
        %v1051 = vmul.f32 %v1011, %v1043
        %1056 = vrot.lane.b32.xlu0 %v1032, 96
        %v1057 = vpop.permute.xlu0 %1056
        %1058 = vrot.lane.b32.xlu0 %v1033, 96
        %v1059 = vpop.permute.xlu0 %1058
        %1060 = vrot.lane.b32.xlu0 %v1034, 96
        %v1061 = vpop.permute.xlu0 %1060
        %1062 = vrot.lane.b32.xlu0 %v1035, 96
        %v1063 = vpop.permute.xlu0 %1062
        %v1065 = vsel %vm724, %v1011, 0
        %v1067 = vsel %vm724, %v1057, 0
        %v1069 = vsel %vm724, %v1059, 0
        %v1071 = vsel %vm724, %v1061, 0
        %v1073 = vsel %vm724, %v1063, 0
        %1075 = vmatprep.subr.mxu0 0.0
        %1076 = vmatpush1.xpose.msra.mxu0 0.0
        %1077 = vmatprep.subr.mxu0 0.0
        %1078 = vmatpush1.xpose.msra.mxu0 0.0
        %1079 = vmatprep.subr.mxu0 0.0
        %1080 = vmatpush1.xpose.msra.mxu0 0.0
        %1081 = vmatprep.subr.mxu0 0.0
        %1082 = vmatpush1.xpose.msra.mxu0 0.0
        %1083 = vmatprep.subr.mxu0 0.0
        %1084 = vmatpush1.xpose.msra.mxu0 0.0
        %1085 = vmatprep.subr.mxu0 0.0
        %1086 = vmatpush1.xpose.msra.mxu0 0.0
        %1087 = vmatprep.subr.mxu0 0.0
        %1088 = vmatpush1.xpose.msra.mxu0 0.0
        %1089 = vmatprep.subr.mxu0 0.0
        %1090 = vmatpush1.xpose.msra.mxu0 0.0
        %1091 = vmatprep.subr.mxu0 0.0
        %1092 = vmatpush1.xpose.msra.mxu0 0.0
        %1093 = vmatprep.subr.mxu0 0.0
        %1094 = vmatpush1.xpose.msra.mxu0 0.0
        %1095 = vmatprep.subr.mxu0 0.0
        %1096 = vmatpush1.xpose.msra.mxu0 0.0
        %1097 = vmatprep.subr.mxu0 0.0
        %1098 = vmatpush1.xpose.msra.mxu0 0.0
        %1099 = vmatprep.subr.mxu0 0.0
        %1100 = vmatpush1.xpose.msra.mxu0 %v1073
        %1101 = vmatprep.subr.mxu0 0.0
        %1102 = vmatpush1.xpose.msra.mxu0 %v1071
        %1103 = vmatprep.subr.mxu0 0.0
        %1104 = vmatpush1.xpose.msra.mxu0 %v1069
        %1105 = vmatprep.subr.mxu0 0.0
        %1106 = vmatpush1.xpose.msra.mxu0 %v1067
        %1107 = vmatprep.subr.mxu0 0.0
        %1108 = vmatpush2.xpose.msra.mxu0 0.0
        %1109 = vmatprep.subr.mxu0 0.0
        %1110 = vmatpush2.xpose.msra.mxu0 0.0
        %1111 = vmatprep.subr.mxu0 0.0
        %1112 = vmatpush2.xpose.msra.mxu0 0.0
        %1113 = vmatprep.subr.mxu0 0.0
        %1114 = vmatpush2.xpose.msra.mxu0 0.0
        %1115 = vmatprep.subr.mxu0 0.0
        %1116 = vmatpush2.xpose.msra.mxu0 0.0
        %1117 = vmatprep.subr.mxu0 0.0
        %1118 = vmatpush2.xpose.msra.mxu0 0.0
        %1119 = vmatprep.subr.mxu0 0.0
        %1120 = vmatpush2.xpose.msra.mxu0 0.0
        %1121 = vmatprep.subr.mxu0 0.0
        %1122 = vmatpush2.xpose.msra.mxu0 0.0
        %1123 = vmatprep.subr.mxu0 0.0
        %1124 = vmatpush2.xpose.msra.mxu0 0.0
        %1125 = vmatprep.subr.mxu0 0.0
        %1126 = vmatpush2.xpose.msra.mxu0 0.0
        %1127 = vmatprep.subr.mxu0 0.0
        %1128 = vmatpush2.xpose.msra.mxu0 0.0
        %1129 = vmatprep.subr.mxu0 0.0
        %1130 = vmatpush2.xpose.msra.mxu0 0.0
        %1131 = vmatprep.subr.mxu0 0.0
        %1132 = vmatpush2.xpose.msra.mxu0 0.0
        %1133 = vmatprep.subr.mxu0 0.0
        %1134 = vmatpush2.xpose.msra.mxu0 0.0
        %1135 = vmatprep.subr.mxu0 0.0
        %1136 = vmatpush2.xpose.msra.mxu0 0.0
        %1137 = vmatprep.subr.mxu0 0.0
        %1138 = vmatpush2.xpose.msra.mxu0 0.0
        %1139 = vmatprep.mubr.f32.mxu0 0.0
        %1140 = vmatmul.mubr.f32.gmra.mxu0 %v1065
        %v1141 = vpop.f32.mrf.mxu0
        %v1142 = vadd.f32 0.0, %v1141
        %v1143 = vpop.f32.mrf.mxu0
        %1144 = vdwg.mxu0
        %v1145 = vmul.f32 %v1142, 2.0
        %v1146 = vadd.f32 %v1145, 2.0
        %v1147 = vstv %s711
        %v1148 = vmul.f32 %v1146, %v1147
        %v1149 = vstv %s712
        %v1150 = vadd.f32 %v1148, %v1149
        %v1151 = vld [vmem:[%s706] sm:$0x1]
        %vm1152 = vcmp.gt.f32.partialorder %v1151, 0.0
        %v1153 = vsel %vm1152, 1, 0
        %v1154 = vlaneseq
        %v1155 = vshrl.u32 %v1154, 7
        %v1156 = vsub.s32 0, %v1155
        %v1157 = vrot.slane %v1153, %v1156
        %vm1158 = vcmp.eq.s32.totalorder %v1157, 1
        %v1159 = vsel %vm1158, -1e+18, %v1150
        %v1160 = vsel %vm724, %v1159, -inf
        %1161 = vmax.xlane.f32.xlu0 %v1160
        %v1162 = vpop.xlane.xlu0 %1161
        %v1163 = vsub.f32 %v1159, %v1162
        %v1164 = vmul.f32 %v1163, 1.442695
        %v1165 = vpow.pop %v1164
        %v1166 = vld [vmem:[%s15] sm:$0xff]
        %v1167 = vld [vmem:[%s15 + $0x8] sm:$0xff]
        %v1168 = vld [vmem:[%s15 + $0x10] sm:$0xff]
        %v1169 = vld [vmem:[%s15 + $0x18] sm:$0xff]
        %v1171 = vsel %vm724, %v1165, 0
        %1173 = vmatprep.subr.mxu0 0.0
        %1174 = vmatpush1.msra.mxu0 0.0
        %1175 = vmatprep.subr.mxu0 0.0
        %1176 = vmatpush1.msra.mxu0 0.0
        %1177 = vmatprep.subr.mxu0 0.0
        %1178 = vmatpush1.msra.mxu0 0.0
        %1179 = vmatprep.subr.mxu0 0.0
        %1180 = vmatpush1.msra.mxu0 0.0
        %1181 = vmatprep.subr.mxu0 0.0
        %1182 = vmatpush1.msra.mxu0 0.0
        %1183 = vmatprep.subr.mxu0 0.0
        %1184 = vmatpush1.msra.mxu0 0.0
        %1185 = vmatprep.subr.mxu0 0.0
        %1186 = vmatpush1.msra.mxu0 0.0
        %1187 = vmatprep.subr.mxu0 0.0
        %1188 = vmatpush1.msra.mxu0 0.0
        %1189 = vmatprep.subr.mxu0 0.0
        %1190 = vmatpush1.msra.mxu0 0.0
        %1191 = vmatprep.subr.mxu0 0.0
        %1192 = vmatpush1.msra.mxu0 0.0
        %1193 = vmatprep.subr.mxu0 0.0
        %1194 = vmatpush1.msra.mxu0 0.0
        %1195 = vmatprep.subr.mxu0 0.0
        %1196 = vmatpush1.msra.mxu0 0.0
        %1197 = vmatprep.subr.mxu0 0.0
        %1198 = vmatpush1.msra.mxu0 %v1169
        %1199 = vmatprep.subr.mxu0 0.0
        %1200 = vmatpush1.msra.mxu0 %v1168
        %1201 = vmatprep.subr.mxu0 0.0
        %1202 = vmatpush1.msra.mxu0 %v1167
        %1203 = vmatprep.subr.mxu0 0.0
        %1204 = vmatpush1.msra.mxu0 %v1166
        %1205 = vmatprep.subr.mxu0 0.0
        %1206 = vmatpush2.msra.mxu0 0.0
        %1207 = vmatprep.subr.mxu0 0.0
        %1208 = vmatpush2.msra.mxu0 0.0
        %1209 = vmatprep.subr.mxu0 0.0
        %1210 = vmatpush2.msra.mxu0 0.0
        %1211 = vmatprep.subr.mxu0 0.0
        %1212 = vmatpush2.msra.mxu0 0.0
        %1213 = vmatprep.subr.mxu0 0.0
        %1214 = vmatpush2.msra.mxu0 0.0
        %1215 = vmatprep.subr.mxu0 0.0
        %1216 = vmatpush2.msra.mxu0 0.0
        %1217 = vmatprep.subr.mxu0 0.0
        %1218 = vmatpush2.msra.mxu0 0.0
        %1219 = vmatprep.subr.mxu0 0.0
        %1220 = vmatpush2.msra.mxu0 0.0
        %1221 = vmatprep.subr.mxu0 0.0
        %1222 = vmatpush2.msra.mxu0 0.0
        %1223 = vmatprep.subr.mxu0 0.0
        %1224 = vmatpush2.msra.mxu0 0.0
        %1225 = vmatprep.subr.mxu0 0.0
        %1226 = vmatpush2.msra.mxu0 0.0
        %1227 = vmatprep.subr.mxu0 0.0
        %1228 = vmatpush2.msra.mxu0 0.0
        %1229 = vmatprep.subr.mxu0 0.0
        %1230 = vmatpush2.msra.mxu0 0.0
        %1231 = vmatprep.subr.mxu0 0.0
        %1232 = vmatpush2.msra.mxu0 0.0
        %1233 = vmatprep.subr.mxu0 0.0
        %1234 = vmatpush2.msra.mxu0 0.0
        %1235 = vmatprep.subr.mxu0 0.0
        %1236 = vmatpush2.msra.mxu0 0.0
        %1237 = vmatprep.mubr.f32.mxu0 0.0
        %1238 = vmatmul.mubr.f32.gmra.mxu0 %v1171
        %v1239 = vpop.f32.mrf.mxu0
        %v1240 = vadd.f32 0.0, %v1239
        %v1241 = vpop.f32.mrf.mxu0
        %1242 = vdwg.mxu0
        %v1243 = vmax.f32 %v1240, 1e-30
        %v1244 = vrcp.pop %v1243
        %v1245 = vmul.f32 %v1165, %v1244
        %1250 = vrot.lane.b32.xlu0 %v1048, 64
        %v1251 = vpop.permute.xlu0 %1250
        %1252 = vrot.lane.b32.xlu0 %v1049, 64
        %v1253 = vpop.permute.xlu0 %1252
        %1254 = vrot.lane.b32.xlu0 %v1050, 64
        %v1255 = vpop.permute.xlu0 %1254
        %1256 = vrot.lane.b32.xlu0 %v1051, 64
        %v1257 = vpop.permute.xlu0 %1256
        %v1263 = vsel %vm724, %v1245, 0
        %1265 = vmatprep.subr.mxu0 0.0
        %1266 = vmatpush1.msra.mxu0 0.0
        %1267 = vmatprep.subr.mxu0 0.0
        %1268 = vmatpush1.msra.mxu0 0.0
        %1269 = vmatprep.subr.mxu0 0.0
        %1270 = vmatpush1.msra.mxu0 0.0
        %1271 = vmatprep.subr.mxu0 0.0
        %1272 = vmatpush1.msra.mxu0 0.0
        %1273 = vmatprep.subr.mxu0 0.0
        %1274 = vmatpush1.msra.mxu0 0.0
        %1275 = vmatprep.subr.mxu0 0.0
        %1276 = vmatpush1.msra.mxu0 0.0
        %1277 = vmatprep.subr.mxu0 0.0
        %1278 = vmatpush1.msra.mxu0 0.0
        %1279 = vmatprep.subr.mxu0 0.0
        %1280 = vmatpush1.msra.mxu0 0.0
        %1281 = vmatprep.subr.mxu0 0.0
        %1282 = vmatpush1.msra.mxu0 0.0
        %1283 = vmatprep.subr.mxu0 0.0
        %1284 = vmatpush1.msra.mxu0 0.0
        %1285 = vmatprep.subr.mxu0 0.0
        %1286 = vmatpush1.msra.mxu0 0.0
        %1287 = vmatprep.subr.mxu0 0.0
        %1288 = vmatpush1.msra.mxu0 0.0
        %1289 = vmatprep.subr.mxu0 0.0
        %1290 = vmatpush1.msra.mxu0 %v1257
        %1291 = vmatprep.subr.mxu0 0.0
        %1292 = vmatpush1.msra.mxu0 %v1255
        %1293 = vmatprep.subr.mxu0 0.0
        %1294 = vmatpush1.msra.mxu0 %v1253
        %1295 = vmatprep.subr.mxu0 0.0
        %1296 = vmatpush1.msra.mxu0 %v1251
        %1297 = vmatprep.subr.mxu0 0.0
        %1298 = vmatpush2.msra.mxu0 0.0
        %1299 = vmatprep.subr.mxu0 0.0
        %1300 = vmatpush2.msra.mxu0 0.0
        %1301 = vmatprep.subr.mxu0 0.0
        %1302 = vmatpush2.msra.mxu0 0.0
        %1303 = vmatprep.subr.mxu0 0.0
        %1304 = vmatpush2.msra.mxu0 0.0
        %1305 = vmatprep.subr.mxu0 0.0
        %1306 = vmatpush2.msra.mxu0 0.0
        %1307 = vmatprep.subr.mxu0 0.0
        %1308 = vmatpush2.msra.mxu0 0.0
        %1309 = vmatprep.subr.mxu0 0.0
        %1310 = vmatpush2.msra.mxu0 0.0
        %1311 = vmatprep.subr.mxu0 0.0
        %1312 = vmatpush2.msra.mxu0 0.0
        %1313 = vmatprep.subr.mxu0 0.0
        %1314 = vmatpush2.msra.mxu0 0.0
        %1315 = vmatprep.subr.mxu0 0.0
        %1316 = vmatpush2.msra.mxu0 0.0
        %1317 = vmatprep.subr.mxu0 0.0
        %1318 = vmatpush2.msra.mxu0 0.0
        %1319 = vmatprep.subr.mxu0 0.0
        %1320 = vmatpush2.msra.mxu0 0.0
        %1321 = vmatprep.subr.mxu0 0.0
        %1322 = vmatpush2.msra.mxu0 0.0
        %1323 = vmatprep.subr.mxu0 0.0
        %1324 = vmatpush2.msra.mxu0 0.0
        %1325 = vmatprep.subr.mxu0 0.0
        %1326 = vmatpush2.msra.mxu0 0.0
        %1327 = vmatprep.subr.mxu0 0.0
        %1328 = vmatpush2.msra.mxu0 0.0
        %1329 = vmatprep.mubr.f32.mxu0 0.0
        %1330 = vmatmul.mubr.f32.gmra.mxu0 %v1263
        %v1331 = vpop.f32.mrf.mxu0
        %v1332 = vadd.f32 0.0, %v1331
        %v1333 = vpop.f32.mrf.mxu0
        %1334 = vdwg.mxu0
        %v1335 = vld [vmem:[%s16] sm:$0x1]
        %v1337 = vlaneseq
        %v1338 = vshrl.u32 %v1337, 7
        %v1339 = vsub.s32 0, %v1338
        %v1340 = vrot.slane %v1335, %v1339
        %v1342 = vmul.f32 %v1332, %v1340
        %v1343 = vld [vmem:[%s17] sm:$0xff]
        %v1344 = vld [vmem:[%s17 + $0x8] sm:$0xff]
        %v1345 = vld [vmem:[%s17 + $0x10] sm:$0xff]
        %v1346 = vld [vmem:[%s17 + $0x18] sm:$0xff]
        %v1348 = vsel %vm724, %v1342, 0
        %1350 = vmatprep.subr.mxu0 0.0
        %1351 = vmatpush1.msra.mxu0 0.0
        %1352 = vmatprep.subr.mxu0 0.0
        %1353 = vmatpush1.msra.mxu0 0.0
        %1354 = vmatprep.subr.mxu0 0.0
        %1355 = vmatpush1.msra.mxu0 0.0
        %1356 = vmatprep.subr.mxu0 0.0
        %1357 = vmatpush1.msra.mxu0 0.0
        %1358 = vmatprep.subr.mxu0 0.0
        %1359 = vmatpush1.msra.mxu0 0.0
        %1360 = vmatprep.subr.mxu0 0.0
        %1361 = vmatpush1.msra.mxu0 0.0
        %1362 = vmatprep.subr.mxu0 0.0
        %1363 = vmatpush1.msra.mxu0 0.0
        %1364 = vmatprep.subr.mxu0 0.0
        %1365 = vmatpush1.msra.mxu0 0.0
        %1366 = vmatprep.subr.mxu0 0.0
        %1367 = vmatpush1.msra.mxu0 0.0
        %1368 = vmatprep.subr.mxu0 0.0
        %1369 = vmatpush1.msra.mxu0 0.0
        %1370 = vmatprep.subr.mxu0 0.0
        %1371 = vmatpush1.msra.mxu0 0.0
        %1372 = vmatprep.subr.mxu0 0.0
        %1373 = vmatpush1.msra.mxu0 0.0
        %1374 = vmatprep.subr.mxu0 0.0
        %1375 = vmatpush1.msra.mxu0 %v1346
        %1376 = vmatprep.subr.mxu0 0.0
        %1377 = vmatpush1.msra.mxu0 %v1345
        %1378 = vmatprep.subr.mxu0 0.0
        %1379 = vmatpush1.msra.mxu0 %v1344
        %1380 = vmatprep.subr.mxu0 0.0
        %1381 = vmatpush1.msra.mxu0 %v1343
        %1382 = vmatprep.subr.mxu0 0.0
        %1383 = vmatpush2.msra.mxu0 0.0
        %1384 = vmatprep.subr.mxu0 0.0
        %1385 = vmatpush2.msra.mxu0 0.0
        %1386 = vmatprep.subr.mxu0 0.0
        %1387 = vmatpush2.msra.mxu0 0.0
        %1388 = vmatprep.subr.mxu0 0.0
        %1389 = vmatpush2.msra.mxu0 0.0
        %1390 = vmatprep.subr.mxu0 0.0
        %1391 = vmatpush2.msra.mxu0 0.0
        %1392 = vmatprep.subr.mxu0 0.0
        %1393 = vmatpush2.msra.mxu0 0.0
        %1394 = vmatprep.subr.mxu0 0.0
        %1395 = vmatpush2.msra.mxu0 0.0
        %1396 = vmatprep.subr.mxu0 0.0
        %1397 = vmatpush2.msra.mxu0 0.0
        %1398 = vmatprep.subr.mxu0 0.0
        %1399 = vmatpush2.msra.mxu0 0.0
        %1400 = vmatprep.subr.mxu0 0.0
        %1401 = vmatpush2.msra.mxu0 0.0
        %1402 = vmatprep.subr.mxu0 0.0
        %1403 = vmatpush2.msra.mxu0 0.0
        %1404 = vmatprep.subr.mxu0 0.0
        %1405 = vmatpush2.msra.mxu0 0.0
        %1406 = vmatprep.subr.mxu0 0.0
        %1407 = vmatpush2.msra.mxu0 0.0
        %1408 = vmatprep.subr.mxu0 0.0
        %1409 = vmatpush2.msra.mxu0 0.0
        %1410 = vmatprep.subr.mxu0 0.0
        %1411 = vmatpush2.msra.mxu0 0.0
        %1412 = vmatprep.subr.mxu0 0.0
        %1413 = vmatpush2.msra.mxu0 0.0
        %1414 = vmatprep.mubr.f32.mxu0 0.0
        %1415 = vmatmul.mubr.f32.gmra.mxu0 %v1348
        %v1416 = vpop.f32.mrf.mxu0
        %v1417 = vadd.f32 0.0, %v1416
        %v1418 = vpop.f32.mrf.mxu0
        %1419 = vdwg.mxu0
        %v1420 = vmul.f32 %v1332, %v1332
        %v1422 = vsel %vm724, %v1420, 0
        %1424 = vmatprep.subr.mxu0 0.0
        %1425 = vmatpush1.msra.mxu0 0.0
        %1426 = vmatprep.subr.mxu0 0.0
        %1427 = vmatpush1.msra.mxu0 0.0
        %1428 = vmatprep.subr.mxu0 0.0
        %1429 = vmatpush1.msra.mxu0 0.0
        %1430 = vmatprep.subr.mxu0 0.0
        %1431 = vmatpush1.msra.mxu0 0.0
        %1432 = vmatprep.subr.mxu0 0.0
        %1433 = vmatpush1.msra.mxu0 0.0
        %1434 = vmatprep.subr.mxu0 0.0
        %1435 = vmatpush1.msra.mxu0 0.0
        %1436 = vmatprep.subr.mxu0 0.0
        %1437 = vmatpush1.msra.mxu0 0.0
        %1438 = vmatprep.subr.mxu0 0.0
        %1439 = vmatpush1.msra.mxu0 0.0
        %1440 = vmatprep.subr.mxu0 0.0
        %1441 = vmatpush1.msra.mxu0 0.0
        %1442 = vmatprep.subr.mxu0 0.0
        %1443 = vmatpush1.msra.mxu0 0.0
        %1444 = vmatprep.subr.mxu0 0.0
        %1445 = vmatpush1.msra.mxu0 0.0
        %1446 = vmatprep.subr.mxu0 0.0
        %1447 = vmatpush1.msra.mxu0 0.0
        %1448 = vmatprep.subr.mxu0 0.0
        %1449 = vmatpush1.msra.mxu0 %v1346
        %1450 = vmatprep.subr.mxu0 0.0
        %1451 = vmatpush1.msra.mxu0 %v1345
        %1452 = vmatprep.subr.mxu0 0.0
        %1453 = vmatpush1.msra.mxu0 %v1344
        %1454 = vmatprep.subr.mxu0 0.0
        %1455 = vmatpush1.msra.mxu0 %v1343
        %1456 = vmatprep.subr.mxu0 0.0
        %1457 = vmatpush2.msra.mxu0 0.0
        %1458 = vmatprep.subr.mxu0 0.0
        %1459 = vmatpush2.msra.mxu0 0.0
        %1460 = vmatprep.subr.mxu0 0.0
        %1461 = vmatpush2.msra.mxu0 0.0
        %1462 = vmatprep.subr.mxu0 0.0
        %1463 = vmatpush2.msra.mxu0 0.0
        %1464 = vmatprep.subr.mxu0 0.0
        %1465 = vmatpush2.msra.mxu0 0.0
        %1466 = vmatprep.subr.mxu0 0.0
        %1467 = vmatpush2.msra.mxu0 0.0
        %1468 = vmatprep.subr.mxu0 0.0
        %1469 = vmatpush2.msra.mxu0 0.0
        %1470 = vmatprep.subr.mxu0 0.0
        %1471 = vmatpush2.msra.mxu0 0.0
        %1472 = vmatprep.subr.mxu0 0.0
        %1473 = vmatpush2.msra.mxu0 0.0
        %1474 = vmatprep.subr.mxu0 0.0
        %1475 = vmatpush2.msra.mxu0 0.0
        %1476 = vmatprep.subr.mxu0 0.0
        %1477 = vmatpush2.msra.mxu0 0.0
        %1478 = vmatprep.subr.mxu0 0.0
        %1479 = vmatpush2.msra.mxu0 0.0
        %1480 = vmatprep.subr.mxu0 0.0
        %1481 = vmatpush2.msra.mxu0 0.0
        %1482 = vmatprep.subr.mxu0 0.0
        %1483 = vmatpush2.msra.mxu0 0.0
        %1484 = vmatprep.subr.mxu0 0.0
        %1485 = vmatpush2.msra.mxu0 0.0
        %1486 = vmatprep.subr.mxu0 0.0
        %1487 = vmatpush2.msra.mxu0 0.0
        %1488 = vmatprep.mubr.f32.mxu0 0.0
        %1489 = vmatmul.mubr.f32.gmra.mxu0 %v1422
        %v1490 = vpop.f32.mrf.mxu0
        %v1491 = vadd.f32 0.0, %v1490
        %v1492 = vpop.f32.mrf.mxu0
        %1493 = vdwg.mxu0
        %v1494 = vmul.f32 %v1417, 2.0
        %v1495 = vmul.f32 %v1494, %v1417
        %v1496 = vsub.f32 %v1491, %v1495
        %v1497 = vand.u32 2147483647, %v1496
        %v1498 = vmax.f32 %v1497, 1e-08
        %v1499 = vrsqrt.pop %v1498
        %v1500 = vmul.f32 %v1332, %v1499
        %v1501 = vld [vmem:[%s18] sm:$0x1]
        %v1502 = vld [vmem:[%s19] sm:$0xff]
        %v1503 = vld [vmem:[%s19 + $0x8] sm:$0xff]
        %v1504 = vld [vmem:[%s19 + $0x10] sm:$0xff]
        %v1505 = vld [vmem:[%s19 + $0x18] sm:$0xff]
        %v1506 = vld [vmem:[%s5] sm:$0xff]
        %v1507 = vld [vmem:[%s5 + $0x8] sm:$0xff]
        %v1508 = vld [vmem:[%s5 + $0x10] sm:$0xff]
        %v1509 = vld [vmem:[%s5 + $0x18] sm:$0xff]
        %v1511 = vsel %vm724, %v1500, 0
        %1513 = vmatprep.subr.mxu0 0.0
        %1514 = vmatpush1.msra.mxu0 0.0
        %1515 = vmatprep.subr.mxu0 0.0
        %1516 = vmatpush1.msra.mxu0 0.0
        %1517 = vmatprep.subr.mxu0 0.0
        %1518 = vmatpush1.msra.mxu0 0.0
        %1519 = vmatprep.subr.mxu0 0.0
        %1520 = vmatpush1.msra.mxu0 0.0
        %1521 = vmatprep.subr.mxu0 0.0
        %1522 = vmatpush1.msra.mxu0 0.0
        %1523 = vmatprep.subr.mxu0 0.0
        %1524 = vmatpush1.msra.mxu0 0.0
        %1525 = vmatprep.subr.mxu0 0.0
        %1526 = vmatpush1.msra.mxu0 0.0
        %1527 = vmatprep.subr.mxu0 0.0
        %1528 = vmatpush1.msra.mxu0 0.0
        %1529 = vmatprep.subr.mxu0 0.0
        %1530 = vmatpush1.msra.mxu0 0.0
        %1531 = vmatprep.subr.mxu0 0.0
        %1532 = vmatpush1.msra.mxu0 0.0
        %1533 = vmatprep.subr.mxu0 0.0
        %1534 = vmatpush1.msra.mxu0 0.0
        %1535 = vmatprep.subr.mxu0 0.0
        %1536 = vmatpush1.msra.mxu0 0.0
        %1537 = vmatprep.subr.mxu0 0.0
        %1538 = vmatpush1.msra.mxu0 %v1509
        %1539 = vmatprep.subr.mxu0 0.0
        %1540 = vmatpush1.msra.mxu0 %v1508
        %1541 = vmatprep.subr.mxu0 0.0
        %1542 = vmatpush1.msra.mxu0 %v1507
        %1543 = vmatprep.subr.mxu0 0.0
        %1544 = vmatpush1.msra.mxu0 %v1506
        %1545 = vmatprep.subr.mxu0 0.0
        %1546 = vmatpush2.msra.mxu0 0.0
        %1547 = vmatprep.subr.mxu0 0.0
        %1548 = vmatpush2.msra.mxu0 0.0
        %1549 = vmatprep.subr.mxu0 0.0
        %1550 = vmatpush2.msra.mxu0 0.0
        %1551 = vmatprep.subr.mxu0 0.0
        %1552 = vmatpush2.msra.mxu0 0.0
        %1553 = vmatprep.subr.mxu0 0.0
        %1554 = vmatpush2.msra.mxu0 0.0
        %1555 = vmatprep.subr.mxu0 0.0
        %1556 = vmatpush2.msra.mxu0 0.0
        %1557 = vmatprep.subr.mxu0 0.0
        %1558 = vmatpush2.msra.mxu0 0.0
        %1559 = vmatprep.subr.mxu0 0.0
        %1560 = vmatpush2.msra.mxu0 0.0
        %1561 = vmatprep.subr.mxu0 0.0
        %1562 = vmatpush2.msra.mxu0 0.0
        %1563 = vmatprep.subr.mxu0 0.0
        %1564 = vmatpush2.msra.mxu0 0.0
        %1565 = vmatprep.subr.mxu0 0.0
        %1566 = vmatpush2.msra.mxu0 0.0
        %1567 = vmatprep.subr.mxu0 0.0
        %1568 = vmatpush2.msra.mxu0 0.0
        %1569 = vmatprep.subr.mxu0 0.0
        %1570 = vmatpush2.msra.mxu0 0.0
        %1571 = vmatprep.subr.mxu0 0.0
        %1572 = vmatpush2.msra.mxu0 0.0
        %1573 = vmatprep.subr.mxu0 0.0
        %1574 = vmatpush2.msra.mxu0 0.0
        %1575 = vmatprep.subr.mxu0 0.0
        %1576 = vmatpush2.msra.mxu0 0.0
        %1577 = vmatprep.mubr.f32.mxu0 0.0
        %1578 = vmatmul.mubr.f32.gmra.mxu0 %v1511
        %v1579 = vpop.f32.mrf.mxu0
        %v1580 = vadd.f32 %v707, %v1579
        %v1581 = vpop.f32.mrf.mxu0
        %1582 = vdwg.mxu0
        %v1584 = vlaneseq
        %v1585 = vshrl.u32 %v1584, 7
        %v1586 = vsub.s32 0, %v1585
        %v1587 = vrot.slane %v1501, %v1586
        %v1589 = vmul.f32 %v1580, %v1587
        %v1591 = vsel %vm724, %v1589, 0
        %1593 = vmatprep.subr.mxu0 0.0
        %1594 = vmatpush1.msra.mxu0 0.0
        %1595 = vmatprep.subr.mxu0 0.0
        %1596 = vmatpush1.msra.mxu0 0.0
        %1597 = vmatprep.subr.mxu0 0.0
        %1598 = vmatpush1.msra.mxu0 0.0
        %1599 = vmatprep.subr.mxu0 0.0
        %1600 = vmatpush1.msra.mxu0 0.0
        %1601 = vmatprep.subr.mxu0 0.0
        %1602 = vmatpush1.msra.mxu0 0.0
        %1603 = vmatprep.subr.mxu0 0.0
        %1604 = vmatpush1.msra.mxu0 0.0
        %1605 = vmatprep.subr.mxu0 0.0
        %1606 = vmatpush1.msra.mxu0 0.0
        %1607 = vmatprep.subr.mxu0 0.0
        %1608 = vmatpush1.msra.mxu0 0.0
        %1609 = vmatprep.subr.mxu0 0.0
        %1610 = vmatpush1.msra.mxu0 0.0
        %1611 = vmatprep.subr.mxu0 0.0
        %1612 = vmatpush1.msra.mxu0 0.0
        %1613 = vmatprep.subr.mxu0 0.0
        %1614 = vmatpush1.msra.mxu0 0.0
        %1615 = vmatprep.subr.mxu0 0.0
        %1616 = vmatpush1.msra.mxu0 0.0
        %1617 = vmatprep.subr.mxu0 0.0
        %1618 = vmatpush1.msra.mxu0 %v1505
        %1619 = vmatprep.subr.mxu0 0.0
        %1620 = vmatpush1.msra.mxu0 %v1504
        %1621 = vmatprep.subr.mxu0 0.0
        %1622 = vmatpush1.msra.mxu0 %v1503
        %1623 = vmatprep.subr.mxu0 0.0
        %1624 = vmatpush1.msra.mxu0 %v1502
        %1625 = vmatprep.subr.mxu0 0.0
        %1626 = vmatpush2.msra.mxu0 0.0
        %1627 = vmatprep.subr.mxu0 0.0
        %1628 = vmatpush2.msra.mxu0 0.0
        %1629 = vmatprep.subr.mxu0 0.0
        %1630 = vmatpush2.msra.mxu0 0.0
        %1631 = vmatprep.subr.mxu0 0.0
        %1632 = vmatpush2.msra.mxu0 0.0
        %1633 = vmatprep.subr.mxu0 0.0
        %1634 = vmatpush2.msra.mxu0 0.0
        %1635 = vmatprep.subr.mxu0 0.0
        %1636 = vmatpush2.msra.mxu0 0.0
        %1637 = vmatprep.subr.mxu0 0.0
        %1638 = vmatpush2.msra.mxu0 0.0
        %1639 = vmatprep.subr.mxu0 0.0
        %1640 = vmatpush2.msra.mxu0 0.0
        %1641 = vmatprep.subr.mxu0 0.0
        %1642 = vmatpush2.msra.mxu0 0.0
        %1643 = vmatprep.subr.mxu0 0.0
        %1644 = vmatpush2.msra.mxu0 0.0
        %1645 = vmatprep.subr.mxu0 0.0
        %1646 = vmatpush2.msra.mxu0 0.0
        %1647 = vmatprep.subr.mxu0 0.0
        %1648 = vmatpush2.msra.mxu0 0.0
        %1649 = vmatprep.subr.mxu0 0.0
        %1650 = vmatpush2.msra.mxu0 0.0
        %1651 = vmatprep.subr.mxu0 0.0
        %1652 = vmatpush2.msra.mxu0 0.0
        %1653 = vmatprep.subr.mxu0 0.0
        %1654 = vmatpush2.msra.mxu0 0.0
        %1655 = vmatprep.subr.mxu0 0.0
        %1656 = vmatpush2.msra.mxu0 0.0
        %1657 = vmatprep.mubr.f32.mxu0 0.0
        %1658 = vmatmul.mubr.f32.gmra.mxu0 %v1591
        %v1659 = vpop.f32.mrf.mxu0
        %v1660 = vadd.f32 0.0, %v1659
        %v1661 = vpop.f32.mrf.mxu0
        %1662 = vdwg.mxu0
        %v1663 = vmul.f32 %v1580, %v1580
        %v1665 = vsel %vm724, %v1663, 0
        %1667 = vmatprep.subr.mxu0 0.0
        %1668 = vmatpush1.msra.mxu0 0.0
        %1669 = vmatprep.subr.mxu0 0.0
        %1670 = vmatpush1.msra.mxu0 0.0
        %1671 = vmatprep.subr.mxu0 0.0
        %1672 = vmatpush1.msra.mxu0 0.0
        %1673 = vmatprep.subr.mxu0 0.0
        %1674 = vmatpush1.msra.mxu0 0.0
        %1675 = vmatprep.subr.mxu0 0.0
        %1676 = vmatpush1.msra.mxu0 0.0
        %1677 = vmatprep.subr.mxu0 0.0
        %1678 = vmatpush1.msra.mxu0 0.0
        %1679 = vmatprep.subr.mxu0 0.0
        %1680 = vmatpush1.msra.mxu0 0.0
        %1681 = vmatprep.subr.mxu0 0.0
        %1682 = vmatpush1.msra.mxu0 0.0
        %1683 = vmatprep.subr.mxu0 0.0
        %1684 = vmatpush1.msra.mxu0 0.0
        %1685 = vmatprep.subr.mxu0 0.0
        %1686 = vmatpush1.msra.mxu0 0.0
        %1687 = vmatprep.subr.mxu0 0.0
        %1688 = vmatpush1.msra.mxu0 0.0
        %1689 = vmatprep.subr.mxu0 0.0
        %1690 = vmatpush1.msra.mxu0 0.0
        %1691 = vmatprep.subr.mxu0 0.0
        %1692 = vmatpush1.msra.mxu0 %v1505
        %1693 = vmatprep.subr.mxu0 0.0
        %1694 = vmatpush1.msra.mxu0 %v1504
        %1695 = vmatprep.subr.mxu0 0.0
        %1696 = vmatpush1.msra.mxu0 %v1503
        %1697 = vmatprep.subr.mxu0 0.0
        %1698 = vmatpush1.msra.mxu0 %v1502
        %1699 = vmatprep.subr.mxu0 0.0
        %1700 = vmatpush2.msra.mxu0 0.0
        %1701 = vmatprep.subr.mxu0 0.0
        %1702 = vmatpush2.msra.mxu0 0.0
        %1703 = vmatprep.subr.mxu0 0.0
        %1704 = vmatpush2.msra.mxu0 0.0
        %1705 = vmatprep.subr.mxu0 0.0
        %1706 = vmatpush2.msra.mxu0 0.0
        %1707 = vmatprep.subr.mxu0 0.0
        %1708 = vmatpush2.msra.mxu0 0.0
        %1709 = vmatprep.subr.mxu0 0.0
        %1710 = vmatpush2.msra.mxu0 0.0
        %1711 = vmatprep.subr.mxu0 0.0
        %1712 = vmatpush2.msra.mxu0 0.0
        %1713 = vmatprep.subr.mxu0 0.0
        %1714 = vmatpush2.msra.mxu0 0.0
        %1715 = vmatprep.subr.mxu0 0.0
        %1716 = vmatpush2.msra.mxu0 0.0
        %1717 = vmatprep.subr.mxu0 0.0
        %1718 = vmatpush2.msra.mxu0 0.0
        %1719 = vmatprep.subr.mxu0 0.0
        %1720 = vmatpush2.msra.mxu0 0.0
        %1721 = vmatprep.subr.mxu0 0.0
        %1722 = vmatpush2.msra.mxu0 0.0
        %1723 = vmatprep.subr.mxu0 0.0
        %1724 = vmatpush2.msra.mxu0 0.0
        %1725 = vmatprep.subr.mxu0 0.0
        %1726 = vmatpush2.msra.mxu0 0.0
        %1727 = vmatprep.subr.mxu0 0.0
        %1728 = vmatpush2.msra.mxu0 0.0
        %1729 = vmatprep.subr.mxu0 0.0
        %1730 = vmatpush2.msra.mxu0 0.0
        %1731 = vmatprep.mubr.f32.mxu0 0.0
        %1732 = vmatmul.mubr.f32.gmra.mxu0 %v1665
        %v1733 = vpop.f32.mrf.mxu0
        %v1734 = vadd.f32 0.0, %v1733
        %v1735 = vpop.f32.mrf.mxu0
        %1736 = vdwg.mxu0
        %v1737 = vmul.f32 %v1660, %v1660
        %v1738 = vsub.f32 %v1734, %v1737
        %v1739 = vmax.f32 %v1738, 1e-08
        %v1740 = vxor.u32 %v1660, 2147483648
        %v1741 = vmul.f32 %v1740, 1.442695
        %v1742 = vpow.pop %v1741
        %v1743 = vadd.f32 %v1742, 1.0
        %v1744 = vrcp.pop %v1743
        %v1745 = vmul.f32 1.0, %v1744
        %v1746 = vstv %s708
        %v1747 = vmul.f32 %v1745, %v1746
        %v1748 = vadd.f32 %v1747, 1.1
        %v1749 = vmul.f32 %v1748, %v1748
        %v1750 = vsub.f32 %v1749, 1.0
        %v1751 = vrsqrt.pop %v1750
        %v1752 = vmul.f32 %v1750, %v1751
        %vm1753 = vcmp.eq.f32.partialorder %v1750, inf
        %v1754 = vsel %vm1753, %v1750, %v1752
        %vm1755 = vcmp.eq.f32.partialorder %v1750, 0.0
        %v1756 = vand.u32 %v1750, 2147483648
        %v1757 = vsel %vm1755, %v1756, %v1754
        %v1758 = vrsqrt.pop %v1739
        %v1759 = vmul.f32 %v1757, %v1758
        %vm1760 = vcmp.gt.f32.partialorder %v1501, 0.5
        %v1761 = vmul.f32 %v1580, %v1759
        %v1762 = vsel %vm1760, 1, 0
        %v1763 = vlaneseq
        %v1764 = vshrl.u32 %v1763, 7
        %v1765 = vsub.s32 0, %v1764
        %v1766 = vrot.slane %v1762, %v1765
        %vm1767 = vcmp.eq.s32.totalorder %v1766, 1
        %v1768 = vsel %vm1767, %v1748, %v1761
        %v1769 = vld [vmem:[%s6] sm:$0xff]
        %v1770 = vld [vmem:[%s6 + $0x8] sm:$0xff]
        %v1771 = vld [vmem:[%s6 + $0x10] sm:$0xff]
        %v1772 = vld [vmem:[%s6 + $0x18] sm:$0xff]
        %v1773 = vld [vmem:[%s7] sm:$0x1]
        %v1775 = vlaneseq
        %v1776 = vshrl.u32 %v1775, 7
        %v1777 = vsub.s32 0, %v1776
        %v1778 = vrot.slane %v1773, %v1777
        %v1781 = vsel %vm724, %v1768, 0
        %1783 = vmatprep.subr.mxu0 0.0
        %1784 = vmatpush1.msra.mxu0 0.0
        %1785 = vmatprep.subr.mxu0 0.0
        %1786 = vmatpush1.msra.mxu0 0.0
        %1787 = vmatprep.subr.mxu0 0.0
        %1788 = vmatpush1.msra.mxu0 0.0
        %1789 = vmatprep.subr.mxu0 0.0
        %1790 = vmatpush1.msra.mxu0 0.0
        %1791 = vmatprep.subr.mxu0 0.0
        %1792 = vmatpush1.msra.mxu0 0.0
        %1793 = vmatprep.subr.mxu0 0.0
        %1794 = vmatpush1.msra.mxu0 0.0
        %1795 = vmatprep.subr.mxu0 0.0
        %1796 = vmatpush1.msra.mxu0 0.0
        %1797 = vmatprep.subr.mxu0 0.0
        %1798 = vmatpush1.msra.mxu0 0.0
        %1799 = vmatprep.subr.mxu0 0.0
        %1800 = vmatpush1.msra.mxu0 0.0
        %1801 = vmatprep.subr.mxu0 0.0
        %1802 = vmatpush1.msra.mxu0 0.0
        %1803 = vmatprep.subr.mxu0 0.0
        %1804 = vmatpush1.msra.mxu0 0.0
        %1805 = vmatprep.subr.mxu0 0.0
        %1806 = vmatpush1.msra.mxu0 0.0
        %1807 = vmatprep.subr.mxu0 0.0
        %1808 = vmatpush1.msra.mxu0 %v1772
        %1809 = vmatprep.subr.mxu0 0.0
        %1810 = vmatpush1.msra.mxu0 %v1771
        %1811 = vmatprep.subr.mxu0 0.0
        %1812 = vmatpush1.msra.mxu0 %v1770
        %1813 = vmatprep.subr.mxu0 0.0
        %1814 = vmatpush1.msra.mxu0 %v1769
        %1815 = vmatprep.subr.mxu0 0.0
        %1816 = vmatpush2.msra.mxu0 0.0
        %1817 = vmatprep.subr.mxu0 0.0
        %1818 = vmatpush2.msra.mxu0 0.0
        %1819 = vmatprep.subr.mxu0 0.0
        %1820 = vmatpush2.msra.mxu0 0.0
        %1821 = vmatprep.subr.mxu0 0.0
        %1822 = vmatpush2.msra.mxu0 0.0
        %1823 = vmatprep.subr.mxu0 0.0
        %1824 = vmatpush2.msra.mxu0 0.0
        %1825 = vmatprep.subr.mxu0 0.0
        %1826 = vmatpush2.msra.mxu0 0.0
        %1827 = vmatprep.subr.mxu0 0.0
        %1828 = vmatpush2.msra.mxu0 0.0
        %1829 = vmatprep.subr.mxu0 0.0
        %1830 = vmatpush2.msra.mxu0 0.0
        %1831 = vmatprep.subr.mxu0 0.0
        %1832 = vmatpush2.msra.mxu0 0.0
        %1833 = vmatprep.subr.mxu0 0.0
        %1834 = vmatpush2.msra.mxu0 0.0
        %1835 = vmatprep.subr.mxu0 0.0
        %1836 = vmatpush2.msra.mxu0 0.0
        %1837 = vmatprep.subr.mxu0 0.0
        %1838 = vmatpush2.msra.mxu0 0.0
        %1839 = vmatprep.subr.mxu0 0.0
        %1840 = vmatpush2.msra.mxu0 0.0
        %1841 = vmatprep.subr.mxu0 0.0
        %1842 = vmatpush2.msra.mxu0 0.0
        %1843 = vmatprep.subr.mxu0 0.0
        %1844 = vmatpush2.msra.mxu0 0.0
        %1845 = vmatprep.subr.mxu0 0.0
        %1846 = vmatpush2.msra.mxu0 0.0
        %1847 = vmatprep.mubr.f32.mxu0 0.0
        %1848 = vmatmul.mubr.f32.gmra.mxu0 %v1781
        %v1849 = vpop.f32.mrf.mxu0
        %v1850 = vadd.f32 %v1778, %v1849
        %v1851 = vpop.f32.mrf.mxu0
        %1852 = vdwg.mxu0
        %v1853 = vld [vmem:[%s20] sm:$0x1]
        %v1854 = vld [vmem:[%s21] sm:$0xff]
        %v1855 = vld [vmem:[%s21 + $0x8] sm:$0xff]
        %v1856 = vld [vmem:[%s21 + $0x10] sm:$0xff]
        %v1857 = vld [vmem:[%s21 + $0x18] sm:$0xff]
        %v1858 = vld [vmem:[%s21 + $0x20] sm:$0xff]
        %v1859 = vld [vmem:[%s21 + $0x28] sm:$0xff]
        %v1860 = vld [vmem:[%s21 + $0x30] sm:$0xff]
        %v1861 = vld [vmem:[%s21 + $0x38] sm:$0xff]
        %v1863 = vlaneseq
        %v1864 = vshrl.u32 %v1863, 7
        %v1865 = vsub.s32 0, %v1864
        %v1866 = vrot.slane %v1853, %v1865
        %v1868 = vmul.f32 %v1850, %v1866
        %vm1869 = vcmask 523264
        %v1871 = vsel %vm1869, %v1868, 0
        %1873 = vmatprep.subr.mxu0 0.0
        %1874 = vmatpush1.msra.mxu0 0.0
        %1875 = vmatprep.subr.mxu0 0.0
        %1876 = vmatpush1.msra.mxu0 0.0
        %1877 = vmatprep.subr.mxu0 0.0
        %1878 = vmatpush1.msra.mxu0 0.0
        %1879 = vmatprep.subr.mxu0 0.0
        %1880 = vmatpush1.msra.mxu0 0.0
        %1881 = vmatprep.subr.mxu0 0.0
        %1882 = vmatpush1.msra.mxu0 0.0
        %1883 = vmatprep.subr.mxu0 0.0
        %1884 = vmatpush1.msra.mxu0 0.0
        %1885 = vmatprep.subr.mxu0 0.0
        %1886 = vmatpush1.msra.mxu0 0.0
        %1887 = vmatprep.subr.mxu0 0.0
        %1888 = vmatpush1.msra.mxu0 0.0
        %1889 = vmatprep.subr.mxu0 0.0
        %1890 = vmatpush1.msra.mxu0 %v1861
        %1891 = vmatprep.subr.mxu0 0.0
        %1892 = vmatpush1.msra.mxu0 %v1860
        %1893 = vmatprep.subr.mxu0 0.0
        %1894 = vmatpush1.msra.mxu0 %v1859
        %1895 = vmatprep.subr.mxu0 0.0
        %1896 = vmatpush1.msra.mxu0 %v1858
        %1897 = vmatprep.subr.mxu0 0.0
        %1898 = vmatpush1.msra.mxu0 %v1857
        %1899 = vmatprep.subr.mxu0 0.0
        %1900 = vmatpush1.msra.mxu0 %v1856
        %1901 = vmatprep.subr.mxu0 0.0
        %1902 = vmatpush1.msra.mxu0 %v1855
        %1903 = vmatprep.subr.mxu0 0.0
        %1904 = vmatpush1.msra.mxu0 %v1854
        %1905 = vmatprep.subr.mxu0 0.0
        %1906 = vmatpush2.msra.mxu0 0.0
        %1907 = vmatprep.subr.mxu0 0.0
        %1908 = vmatpush2.msra.mxu0 0.0
        %1909 = vmatprep.subr.mxu0 0.0
        %1910 = vmatpush2.msra.mxu0 0.0
        %1911 = vmatprep.subr.mxu0 0.0
        %1912 = vmatpush2.msra.mxu0 0.0
        %1913 = vmatprep.subr.mxu0 0.0
        %1914 = vmatpush2.msra.mxu0 0.0
        %1915 = vmatprep.subr.mxu0 0.0
        %1916 = vmatpush2.msra.mxu0 0.0
        %1917 = vmatprep.subr.mxu0 0.0
        %1918 = vmatpush2.msra.mxu0 0.0
        %1919 = vmatprep.subr.mxu0 0.0
        %1920 = vmatpush2.msra.mxu0 0.0
        %1921 = vmatprep.subr.mxu0 0.0
        %1922 = vmatpush2.msra.mxu0 0.0
        %1923 = vmatprep.subr.mxu0 0.0
        %1924 = vmatpush2.msra.mxu0 0.0
        %1925 = vmatprep.subr.mxu0 0.0
        %1926 = vmatpush2.msra.mxu0 0.0
        %1927 = vmatprep.subr.mxu0 0.0
        %1928 = vmatpush2.msra.mxu0 0.0
        %1929 = vmatprep.subr.mxu0 0.0
        %1930 = vmatpush2.msra.mxu0 0.0
        %1931 = vmatprep.subr.mxu0 0.0
        %1932 = vmatpush2.msra.mxu0 0.0
        %1933 = vmatprep.subr.mxu0 0.0
        %1934 = vmatpush2.msra.mxu0 0.0
        %1935 = vmatprep.subr.mxu0 0.0
        %1936 = vmatpush2.msra.mxu0 0.0
        %1937 = vmatprep.mubr.f32.mxu0 0.0
        %1938 = vmatmul.mubr.f32.gmra.mxu0 %v1871
        %v1939 = vpop.f32.mrf.mxu0
        %v1940 = vadd.f32 0.0, %v1939
        %v1941 = vpop.f32.mrf.mxu0
        %1942 = vdwg.mxu0
        %v1943 = vmul.f32 %v1850, %v1850
        %v1945 = vsel %vm1869, %v1943, 0
        %1947 = vmatprep.subr.mxu0 0.0
        %1948 = vmatpush1.msra.mxu0 0.0
        %1949 = vmatprep.subr.mxu0 0.0
        %1950 = vmatpush1.msra.mxu0 0.0
        %1951 = vmatprep.subr.mxu0 0.0
        %1952 = vmatpush1.msra.mxu0 0.0
        %1953 = vmatprep.subr.mxu0 0.0
        %1954 = vmatpush1.msra.mxu0 0.0
        %1955 = vmatprep.subr.mxu0 0.0
        %1956 = vmatpush1.msra.mxu0 0.0
        %1957 = vmatprep.subr.mxu0 0.0
        %1958 = vmatpush1.msra.mxu0 0.0
        %1959 = vmatprep.subr.mxu0 0.0
        %1960 = vmatpush1.msra.mxu0 0.0
        %1961 = vmatprep.subr.mxu0 0.0
        %1962 = vmatpush1.msra.mxu0 0.0
        %1963 = vmatprep.subr.mxu0 0.0
        %1964 = vmatpush1.msra.mxu0 %v1861
        %1965 = vmatprep.subr.mxu0 0.0
        %1966 = vmatpush1.msra.mxu0 %v1860
        %1967 = vmatprep.subr.mxu0 0.0
        %1968 = vmatpush1.msra.mxu0 %v1859
        %1969 = vmatprep.subr.mxu0 0.0
        %1970 = vmatpush1.msra.mxu0 %v1858
        %1971 = vmatprep.subr.mxu0 0.0
        %1972 = vmatpush1.msra.mxu0 %v1857
        %1973 = vmatprep.subr.mxu0 0.0
        %1974 = vmatpush1.msra.mxu0 %v1856
        %1975 = vmatprep.subr.mxu0 0.0
        %1976 = vmatpush1.msra.mxu0 %v1855
        %1977 = vmatprep.subr.mxu0 0.0
        %1978 = vmatpush1.msra.mxu0 %v1854
        %1979 = vmatprep.subr.mxu0 0.0
        %1980 = vmatpush2.msra.mxu0 0.0
        %1981 = vmatprep.subr.mxu0 0.0
        %1982 = vmatpush2.msra.mxu0 0.0
        %1983 = vmatprep.subr.mxu0 0.0
        %1984 = vmatpush2.msra.mxu0 0.0
        %1985 = vmatprep.subr.mxu0 0.0
        %1986 = vmatpush2.msra.mxu0 0.0
        %1987 = vmatprep.subr.mxu0 0.0
        %1988 = vmatpush2.msra.mxu0 0.0
        %1989 = vmatprep.subr.mxu0 0.0
        %1990 = vmatpush2.msra.mxu0 0.0
        %1991 = vmatprep.subr.mxu0 0.0
        %1992 = vmatpush2.msra.mxu0 0.0
        %1993 = vmatprep.subr.mxu0 0.0
        %1994 = vmatpush2.msra.mxu0 0.0
        %1995 = vmatprep.subr.mxu0 0.0
        %1996 = vmatpush2.msra.mxu0 0.0
        %1997 = vmatprep.subr.mxu0 0.0
        %1998 = vmatpush2.msra.mxu0 0.0
        %1999 = vmatprep.subr.mxu0 0.0
        %2000 = vmatpush2.msra.mxu0 0.0
        %2001 = vmatprep.subr.mxu0 0.0
        %2002 = vmatpush2.msra.mxu0 0.0
        %2003 = vmatprep.subr.mxu0 0.0
        %2004 = vmatpush2.msra.mxu0 0.0
        %2005 = vmatprep.subr.mxu0 0.0
        %2006 = vmatpush2.msra.mxu0 0.0
        %2007 = vmatprep.subr.mxu0 0.0
        %2008 = vmatpush2.msra.mxu0 0.0
        %2009 = vmatprep.subr.mxu0 0.0
        %2010 = vmatpush2.msra.mxu0 0.0
        %2011 = vmatprep.mubr.f32.mxu0 0.0
        %2012 = vmatmul.mubr.f32.gmra.mxu0 %v1945
        %v2013 = vpop.f32.mrf.mxu0
        %v2014 = vadd.f32 0.0, %v2013
        %v2015 = vpop.f32.mrf.mxu0
        %2016 = vdwg.mxu0
        %v2017 = vmul.f32 %v1940, %v1940
        %v2018 = vsub.f32 %v2014, %v2017
        %v2019 = vmax.f32 %v2018, 1e-08
        %v2020 = vxor.u32 %v1940, 2147483648
        %v2021 = vmul.f32 %v2020, 1.442695
        %v2022 = vpow.pop %v2021
        %v2023 = vadd.f32 %v2022, 1.0
        %v2024 = vrcp.pop %v2023
        %v2025 = vmul.f32 1.0, %v2024
        %v2026 = vstv %s709
        %v2027 = vmul.f32 %v2025, %v2026
        %v2028 = vadd.f32 %v2027, 1.1
        %v2029 = vmul.f32 %v2028, %v2028
        %v2030 = vsub.f32 %v2029, 1.0
        %v2031 = vrsqrt.pop %v2030
        %v2032 = vmul.f32 %v2030, %v2031
        %vm2033 = vcmp.eq.f32.partialorder %v2030, inf
        %v2034 = vsel %vm2033, %v2030, %v2032
        %vm2035 = vcmp.eq.f32.partialorder %v2030, 0.0
        %v2036 = vand.u32 %v2030, 2147483648
        %v2037 = vsel %vm2035, %v2036, %v2034
        %v2038 = vrsqrt.pop %v2019
        %v2039 = vmul.f32 %v2037, %v2038
        %vm2040 = vcmp.gt.f32.partialorder %v1853, 0.5
        %v2041 = vmul.f32 %v1850, %v2039
        %v2042 = vsel %vm2040, 1, 0
        %v2043 = vlaneseq
        %v2044 = vshrl.u32 %v2043, 7
        %v2045 = vsub.s32 0, %v2044
        %v2046 = vrot.slane %v2042, %v2045
        %vm2047 = vcmp.eq.s32.totalorder %v2046, 1
        %v2048 = vsel %vm2047, %v2028, %v2041
        %v2049 = vld [vmem:[%s8] sm:$0xff]
        %v2050 = vld [vmem:[%s8 + $0x8] sm:$0xff]
        %v2051 = vld [vmem:[%s8 + $0x10] sm:$0xff]
        %v2052 = vld [vmem:[%s8 + $0x18] sm:$0xff]
        %v2053 = vld [vmem:[%s8 + $0x20] sm:$0xff]
        %v2054 = vld [vmem:[%s8 + $0x28] sm:$0xff]
        %v2055 = vld [vmem:[%s8 + $0x30] sm:$0xff]
        %v2056 = vld [vmem:[%s8 + $0x38] sm:$0xff]
        %v2057 = vld [vmem:[%s9] sm:$0x1]
        %v2059 = vlaneseq
        %v2060 = vshrl.u32 %v2059, 7
        %v2061 = vsub.s32 0, %v2060
        %v2062 = vrot.slane %v2057, %v2061
        %v2065 = vsel %vm1869, %v2048, 0
        %2067 = vmatprep.subr.mxu0 0.0
        %2068 = vmatpush1.msra.mxu0 0.0
        %2069 = vmatprep.subr.mxu0 0.0
        %2070 = vmatpush1.msra.mxu0 0.0
        %2071 = vmatprep.subr.mxu0 0.0
        %2072 = vmatpush1.msra.mxu0 0.0
        %2073 = vmatprep.subr.mxu0 0.0
        %2074 = vmatpush1.msra.mxu0 0.0
        %2075 = vmatprep.subr.mxu0 0.0
        %2076 = vmatpush1.msra.mxu0 0.0
        %2077 = vmatprep.subr.mxu0 0.0
        %2078 = vmatpush1.msra.mxu0 0.0
        %2079 = vmatprep.subr.mxu0 0.0
        %2080 = vmatpush1.msra.mxu0 0.0
        %2081 = vmatprep.subr.mxu0 0.0
        %2082 = vmatpush1.msra.mxu0 0.0
        %2083 = vmatprep.subr.mxu0 0.0
        %2084 = vmatpush1.msra.mxu0 %v2056
        %2085 = vmatprep.subr.mxu0 0.0
        %2086 = vmatpush1.msra.mxu0 %v2055
        %2087 = vmatprep.subr.mxu0 0.0
        %2088 = vmatpush1.msra.mxu0 %v2054
        %2089 = vmatprep.subr.mxu0 0.0
        %2090 = vmatpush1.msra.mxu0 %v2053
        %2091 = vmatprep.subr.mxu0 0.0
        %2092 = vmatpush1.msra.mxu0 %v2052
        %2093 = vmatprep.subr.mxu0 0.0
        %2094 = vmatpush1.msra.mxu0 %v2051
        %2095 = vmatprep.subr.mxu0 0.0
        %2096 = vmatpush1.msra.mxu0 %v2050
        %2097 = vmatprep.subr.mxu0 0.0
        %2098 = vmatpush1.msra.mxu0 %v2049
        %2099 = vmatprep.subr.mxu0 0.0
        %2100 = vmatpush2.msra.mxu0 0.0
        %2101 = vmatprep.subr.mxu0 0.0
        %2102 = vmatpush2.msra.mxu0 0.0
        %2103 = vmatprep.subr.mxu0 0.0
        %2104 = vmatpush2.msra.mxu0 0.0
        %2105 = vmatprep.subr.mxu0 0.0
        %2106 = vmatpush2.msra.mxu0 0.0
        %2107 = vmatprep.subr.mxu0 0.0
        %2108 = vmatpush2.msra.mxu0 0.0
        %2109 = vmatprep.subr.mxu0 0.0
        %2110 = vmatpush2.msra.mxu0 0.0
        %2111 = vmatprep.subr.mxu0 0.0
        %2112 = vmatpush2.msra.mxu0 0.0
        %2113 = vmatprep.subr.mxu0 0.0
        %2114 = vmatpush2.msra.mxu0 0.0
        %2115 = vmatprep.subr.mxu0 0.0
        %2116 = vmatpush2.msra.mxu0 0.0
        %2117 = vmatprep.subr.mxu0 0.0
        %2118 = vmatpush2.msra.mxu0 0.0
        %2119 = vmatprep.subr.mxu0 0.0
        %2120 = vmatpush2.msra.mxu0 0.0
        %2121 = vmatprep.subr.mxu0 0.0
        %2122 = vmatpush2.msra.mxu0 0.0
        %2123 = vmatprep.subr.mxu0 0.0
        %2124 = vmatpush2.msra.mxu0 0.0
        %2125 = vmatprep.subr.mxu0 0.0
        %2126 = vmatpush2.msra.mxu0 0.0
        %2127 = vmatprep.subr.mxu0 0.0
        %2128 = vmatpush2.msra.mxu0 0.0
        %2129 = vmatprep.subr.mxu0 0.0
        %2130 = vmatpush2.msra.mxu0 0.0
        %2131 = vmatprep.mubr.f32.mxu0 0.0
        %2132 = vmatmul.mubr.f32.gmra.mxu0 %v2065
        %v2133 = vpop.f32.mrf.mxu0
        %v2134 = vadd.f32 %v2062, %v2133
        %v2135 = vpop.f32.mrf.mxu0
        %2136 = vdwg.mxu0
        %v2137 = vadd.f32 %v2134, %v1768
        %v2138 = vmul.f32 %v2137, %v1587
        %v2140 = vsel %vm724, %v2138, 0
        %2142 = vmatprep.subr.mxu0 0.0
        %2143 = vmatpush1.msra.mxu0 0.0
        %2144 = vmatprep.subr.mxu0 0.0
        %2145 = vmatpush1.msra.mxu0 0.0
        %2146 = vmatprep.subr.mxu0 0.0
        %2147 = vmatpush1.msra.mxu0 0.0
        %2148 = vmatprep.subr.mxu0 0.0
        %2149 = vmatpush1.msra.mxu0 0.0
        %2150 = vmatprep.subr.mxu0 0.0
        %2151 = vmatpush1.msra.mxu0 0.0
        %2152 = vmatprep.subr.mxu0 0.0
        %2153 = vmatpush1.msra.mxu0 0.0
        %2154 = vmatprep.subr.mxu0 0.0
        %2155 = vmatpush1.msra.mxu0 0.0
        %2156 = vmatprep.subr.mxu0 0.0
        %2157 = vmatpush1.msra.mxu0 0.0
        %2158 = vmatprep.subr.mxu0 0.0
        %2159 = vmatpush1.msra.mxu0 0.0
        %2160 = vmatprep.subr.mxu0 0.0
        %2161 = vmatpush1.msra.mxu0 0.0
        %2162 = vmatprep.subr.mxu0 0.0
        %2163 = vmatpush1.msra.mxu0 0.0
        %2164 = vmatprep.subr.mxu0 0.0
        %2165 = vmatpush1.msra.mxu0 0.0
        %2166 = vmatprep.subr.mxu0 0.0
        %2167 = vmatpush1.msra.mxu0 %v1505
        %2168 = vmatprep.subr.mxu0 0.0
        %2169 = vmatpush1.msra.mxu0 %v1504
        %2170 = vmatprep.subr.mxu0 0.0
        %2171 = vmatpush1.msra.mxu0 %v1503
        %2172 = vmatprep.subr.mxu0 0.0
        %2173 = vmatpush1.msra.mxu0 %v1502
        %2174 = vmatprep.subr.mxu0 0.0
        %2175 = vmatpush2.msra.mxu0 0.0
        %2176 = vmatprep.subr.mxu0 0.0
        %2177 = vmatpush2.msra.mxu0 0.0
        %2178 = vmatprep.subr.mxu0 0.0
        %2179 = vmatpush2.msra.mxu0 0.0
        %2180 = vmatprep.subr.mxu0 0.0
        %2181 = vmatpush2.msra.mxu0 0.0
        %2182 = vmatprep.subr.mxu0 0.0
        %2183 = vmatpush2.msra.mxu0 0.0
        %2184 = vmatprep.subr.mxu0 0.0
        %2185 = vmatpush2.msra.mxu0 0.0
        %2186 = vmatprep.subr.mxu0 0.0
        %2187 = vmatpush2.msra.mxu0 0.0
        %2188 = vmatprep.subr.mxu0 0.0
        %2189 = vmatpush2.msra.mxu0 0.0
        %2190 = vmatprep.subr.mxu0 0.0
        %2191 = vmatpush2.msra.mxu0 0.0
        %2192 = vmatprep.subr.mxu0 0.0
        %2193 = vmatpush2.msra.mxu0 0.0
        %2194 = vmatprep.subr.mxu0 0.0
        %2195 = vmatpush2.msra.mxu0 0.0
        %2196 = vmatprep.subr.mxu0 0.0
        %2197 = vmatpush2.msra.mxu0 0.0
        %2198 = vmatprep.subr.mxu0 0.0
        %2199 = vmatpush2.msra.mxu0 0.0
        %2200 = vmatprep.subr.mxu0 0.0
        %2201 = vmatpush2.msra.mxu0 0.0
        %2202 = vmatprep.subr.mxu0 0.0
        %2203 = vmatpush2.msra.mxu0 0.0
        %2204 = vmatprep.subr.mxu0 0.0
        %2205 = vmatpush2.msra.mxu0 0.0
        %2206 = vmatprep.mubr.f32.mxu0 0.0
        %2207 = vmatmul.mubr.f32.gmra.mxu0 %v2140
        %v2208 = vpop.f32.mrf.mxu0
        %v2209 = vadd.f32 0.0, %v2208
        %v2210 = vpop.f32.mrf.mxu0
        %2211 = vdwg.mxu0
        %v2212 = vmul.f32 %v2137, %v2137
        %v2214 = vsel %vm724, %v2212, 0
        %2216 = vmatprep.subr.mxu0 0.0
        %2217 = vmatpush1.msra.mxu0 0.0
        %2218 = vmatprep.subr.mxu0 0.0
        %2219 = vmatpush1.msra.mxu0 0.0
        %2220 = vmatprep.subr.mxu0 0.0
        %2221 = vmatpush1.msra.mxu0 0.0
        %2222 = vmatprep.subr.mxu0 0.0
        %2223 = vmatpush1.msra.mxu0 0.0
        %2224 = vmatprep.subr.mxu0 0.0
        %2225 = vmatpush1.msra.mxu0 0.0
        %2226 = vmatprep.subr.mxu0 0.0
        %2227 = vmatpush1.msra.mxu0 0.0
        %2228 = vmatprep.subr.mxu0 0.0
        %2229 = vmatpush1.msra.mxu0 0.0
        %2230 = vmatprep.subr.mxu0 0.0
        %2231 = vmatpush1.msra.mxu0 0.0
        %2232 = vmatprep.subr.mxu0 0.0
        %2233 = vmatpush1.msra.mxu0 0.0
        %2234 = vmatprep.subr.mxu0 0.0
        %2235 = vmatpush1.msra.mxu0 0.0
        %2236 = vmatprep.subr.mxu0 0.0
        %2237 = vmatpush1.msra.mxu0 0.0
        %2238 = vmatprep.subr.mxu0 0.0
        %2239 = vmatpush1.msra.mxu0 0.0
        %2240 = vmatprep.subr.mxu0 0.0
        %2241 = vmatpush1.msra.mxu0 %v1505
        %2242 = vmatprep.subr.mxu0 0.0
        %2243 = vmatpush1.msra.mxu0 %v1504
        %2244 = vmatprep.subr.mxu0 0.0
        %2245 = vmatpush1.msra.mxu0 %v1503
        %2246 = vmatprep.subr.mxu0 0.0
        %2247 = vmatpush1.msra.mxu0 %v1502
        %2248 = vmatprep.subr.mxu0 0.0
        %2249 = vmatpush2.msra.mxu0 0.0
        %2250 = vmatprep.subr.mxu0 0.0
        %2251 = vmatpush2.msra.mxu0 0.0
        %2252 = vmatprep.subr.mxu0 0.0
        %2253 = vmatpush2.msra.mxu0 0.0
        %2254 = vmatprep.subr.mxu0 0.0
        %2255 = vmatpush2.msra.mxu0 0.0
        %2256 = vmatprep.subr.mxu0 0.0
        %2257 = vmatpush2.msra.mxu0 0.0
        %2258 = vmatprep.subr.mxu0 0.0
        %2259 = vmatpush2.msra.mxu0 0.0
        %2260 = vmatprep.subr.mxu0 0.0
        %2261 = vmatpush2.msra.mxu0 0.0
        %2262 = vmatprep.subr.mxu0 0.0
        %2263 = vmatpush2.msra.mxu0 0.0
        %2264 = vmatprep.subr.mxu0 0.0
        %2265 = vmatpush2.msra.mxu0 0.0
        %2266 = vmatprep.subr.mxu0 0.0
        %2267 = vmatpush2.msra.mxu0 0.0
        %2268 = vmatprep.subr.mxu0 0.0
        %2269 = vmatpush2.msra.mxu0 0.0
        %2270 = vmatprep.subr.mxu0 0.0
        %2271 = vmatpush2.msra.mxu0 0.0
        %2272 = vmatprep.subr.mxu0 0.0
        %2273 = vmatpush2.msra.mxu0 0.0
        %2274 = vmatprep.subr.mxu0 0.0
        %2275 = vmatpush2.msra.mxu0 0.0
        %2276 = vmatprep.subr.mxu0 0.0
        %2277 = vmatpush2.msra.mxu0 0.0
        %2278 = vmatprep.subr.mxu0 0.0
        %2279 = vmatpush2.msra.mxu0 0.0
        %2280 = vmatprep.mubr.f32.mxu0 0.0
        %2281 = vmatmul.mubr.f32.gmra.mxu0 %v2214
        %v2282 = vpop.f32.mrf.mxu0
        %v2283 = vadd.f32 0.0, %v2282
        %v2284 = vpop.f32.mrf.mxu0
        %2285 = vdwg.mxu0
        %v2286 = vmul.f32 %v2209, %v2209
        %v2287 = vsub.f32 %v2283, %v2286
        %v2288 = vmax.f32 %v2287, 1e-08
        %v2289 = vxor.u32 %v2209, 2147483648
        %v2290 = vmul.f32 %v2289, 1.442695
        %v2291 = vpow.pop %v2290
        %v2292 = vadd.f32 %v2291, 1.0
        %v2293 = vrcp.pop %v2292
        %v2294 = vmul.f32 1.0, %v2293
        %v2295 = vstv %s710
        %v2296 = vmul.f32 %v2294, %v2295
        %v2297 = vadd.f32 %v2296, 1.1
        %v2298 = vmul.f32 %v2297, %v2297
        %v2299 = vsub.f32 %v2298, 1.0
        %v2300 = vrsqrt.pop %v2299
        %v2301 = vmul.f32 %v2299, %v2300
        %vm2302 = vcmp.eq.f32.partialorder %v2299, inf
        %v2303 = vsel %vm2302, %v2299, %v2301
        %vm2304 = vcmp.eq.f32.partialorder %v2299, 0.0
        %v2305 = vand.u32 %v2299, 2147483648
        %v2306 = vsel %vm2304, %v2305, %v2303
        %v2307 = vrsqrt.pop %v2288
        %v2308 = vmul.f32 %v2306, %v2307
        %v2309 = vmul.f32 %v2137, %v2308
        %v2310 = vsel %vm1767, %v2297, %v2309
        %2311 = vst.msk [vmem:[%s699] sm:$0xff] %vm724, %v2310
        %s2312 = sand.u32 %s517, 1
        %s2313 = scalar_lea.sflag [#allocation3], %s2312
        %s2314 = sand.u32 %s517, 1
        %s2315 = smul.addr %s2314, 8
        %s2316 = scalar_lea.vmem [#allocation5], %s2315
        // Predicated region
        $region113: #{lorentz_encoder_layer.1} parent=107 // pred_check
          %p2317 = pneg %p527
        $region114: #{lorentz_encoder_layer.1} parent=107 // pred_check_branch
          %2319 = sbr.rel (%p2317) target = $region116
        $region115: #{lorentz_encoder_layer.1} parent=107 // pred_region
          %s2321 = ssub.s32 128, 128
          %2322 = vsyncadd %s2313, %s2321
          %s2323 = smul.addr %s37, 128
          %s2324 = scalar_lea.hbm %s22, %s2323
          %s2326 = sshll.u32 %s2316, 4
          %s2327 = int_to_ptr.vmem [resolvable:$true] %s2326
          %2329 = dma.vmem_to_hbm [thread:$0]  %s2327, 128, %s2324, %s2313
        $region116: #{lorentz_encoder_layer.1} parent=107 // pred_fallthru
          _
      $region108: #{lorentz_encoder_layer.1} parent=5 // pred_fallthru
        _
      %p2330 = scmp.le.s32.totalorder 2, %s32
      // Predicated region
      $region117: #{lorentz_encoder_layer.1} parent=5 // pred_check
        %p2331 = pneg %p2330
      $region118: #{lorentz_encoder_layer.1} parent=5 // pred_check_branch
        %2333 = sbr.rel (%p2331) target = $region120
      $region119: #{lorentz_encoder_layer.1} parent=5 // pred_region
        %s2334 = ssub.s32 %s32, 2
        // Predicated region
        $region121: #{lorentz_encoder_layer.1} parent=119 // pred_check
          %p2335 = pneg %p533
        $region122: #{lorentz_encoder_layer.1} parent=119 // pred_check_branch
          %2337 = sbr.rel (%p2335) target = $region124
        $region123: #{lorentz_encoder_layer.1} parent=119 // pred_region
          %s2338 = sand.u32 %s518, 1
          %s2339 = scalar_lea.sflag [#allocation3], %s2338
          %s2340 = sand.u32 %s518, 1
          %s2341 = smul.addr %s2340, 8
          %s2342 = scalar_lea.vmem [#allocation5], %s2341
          %2343 = dma.done %s2339, 128
        $region124: #{lorentz_encoder_layer.1} parent=119 // pred_fallthru
          _
      $region120: #{lorentz_encoder_layer.1} parent=5 // pred_fallthru
        _
    $region6: #{lorentz_encoder_layer.1} parent=1 // loop_footer
      %s36 = sadd.s32 1, %s32
    $region7: #{lorentz_encoder_layer.1} parent=1 // loop_footer_branch
      %31 = sbr.rel target = $region3
    $region8: #{lorentz_encoder_layer.1} parent=1 // loop_exit
      _
    %2344 = vsyncpa [#allocation3], 1
    %s2345 = scalar_lea.sflag [#allocation3], 1
    %2346 = vsyncpa %s2345, 1
    %2347 = vsyncpa [#allocation4], 1
    %s2348 = scalar_lea.sflag [#allocation4], 1
    %2349 = vsyncpa %s2348, 1

</llo_original>
